<compile_context>
chip_gen: v6e
topology: v6e:2x2x1
jax: 0.10.0
libtpu: 0.0.40
codegen_flags: <defaults>
</compile_context>

<pallas_src>
import math
from functools import partial

import jax
import jax.numpy as jnp
from jax.experimental import pallas as pl
from jax.experimental.pallas import tpu as pltpu

BN_EPS = 1e-5


# ----------------------------------------------------------------------------
# Fused matmul + BN-bias (+ residual) (+ ReLU) Pallas kernel
# ----------------------------------------------------------------------------
def _mm_kernel(a_ref, b_ref, bias_ref, *rest, relu, has_res):
    if has_res:
        res_ref, o_ref, acc_ref = rest
    else:
        o_ref, acc_ref = rest

    k = pl.program_id(2)

    @pl.when(k == 0)
    def _():
        acc_ref[...] = jnp.zeros_like(acc_ref)

    acc_ref[...] += jnp.dot(a_ref[...], b_ref[...],
                            preferred_element_type=jnp.float32)

    @pl.when(k == pl.num_programs(2) - 1)
    def _():
        out = acc_ref[...] + bias_ref[...]
        if has_res:
            out = out + res_ref[...].astype(jnp.float32)
        if relu:
            out = jnp.maximum(out, 0.0)
        o_ref[...] = out.astype(o_ref.dtype)


def _round_up(x, m):
    return ((x + m - 1) // m) * m


def _choose_tile(dim, cap, unit):
    """Largest multiple of `unit` that divides `dim` and is <= cap (dim % unit == 0)."""
    t = max((min(cap, dim) // unit) * unit, unit)
    while dim % t:
        t -= unit
    return t


def fused_matmul(a, b, bias, residual=None, relu=True, out_dtype=jnp.bfloat16):
    """(M,K) @ (K,N) + bias (+ residual) (+ ReLU), bf16 operands / f32 accumulation."""
    M, K = a.shape
    K2, N = b.shape
    assert K == K2

    # --- ragged-dim handling: pad to tile-friendly sizes, slice the result back. ---
    if M >= 512:
        Mp, tm = _round_up(M, 512), 512
    else:
        Mp = _round_up(M, 8)
        tm = Mp
    if K > 1024:
        Kp = _round_up(K, 128)
        tk = _choose_tile(Kp, 768, 128)
    else:
        Kp, tk = K, K                      # single reduction step, full-K block
    Np = _round_up(N, 128)
    tn = _choose_tile(Np, 512, 128)

    a_p = a if (Mp == M and Kp == K) else jnp.pad(a, ((0, Mp - M), (0, Kp - K)))
    b_p = b if (Kp == K and Np == N) else jnp.pad(b, ((0, Kp - K), (0, Np - N)))
    bias_p = bias if Np == N else jnp.pad(bias, ((0, Np - N),))

    a_p = a_p.astype(jnp.bfloat16)
    b_p = b_p.astype(jnp.bfloat16)
    bias_p = bias_p.reshape(1, Np).astype(jnp.float32)

    in_specs = [
        pl.BlockSpec((tm, tk), lambda i, j, k: (i, k)),
        pl.BlockSpec((tk, tn), lambda i, j, k: (k, j)),
        pl.BlockSpec((1, tn), lambda i, j, k: (0, j)),
    ]
    args = [a_p, b_p, bias_p]

    has_res = residual is not None
    if has_res:
        r_p = residual
        if Mp != M or Np != N:
            r_p = jnp.pad(r_p, ((0, Mp - M), (0, Np - N)))
        args.append(r_p.astype(jnp.bfloat16))
        in_specs.append(pl.BlockSpec((tm, tn), lambda i, j, k: (i, j)))

    grid = (Mp // tm, Np // tn, Kp // tk)
    kernel = partial(_mm_kernel, relu=relu, has_res=has_res)

    out = pl.pallas_call(
        kernel,
        out_shape=jax.ShapeDtypeStruct((Mp, Np), out_dtype),
        grid=grid,
        in_specs=in_specs,
        out_specs=pl.BlockSpec((tm, tn), lambda i, j, k: (i, j)),
        scratch_shapes=[pltpu.VMEM((tm, tn), jnp.float32)],
        compiler_params=pltpu.CompilerParams(
            dimension_semantics=("parallel", "parallel", "arbitrary"),
            vmem_limit_bytes=32 * 1024 * 1024,
        ),
    )(*args)

    if Mp != M or Np != N:
        out = out[:M, :N]
    return out


# ----------------------------------------------------------------------------
# Conv glue (im2col only for spatial kernels; 1x1 convs are a pure reshape)
# ----------------------------------------------------------------------------
def im2col(x, kh, kw, stride, pad, dilation=1):
    # x: (N, H, W, C) -> (N*OH*OW, KH*KW*C), patch order [kh, kw, cin]
    n, h, w, c = x.shape
    oh = (h + 2 * pad - dilation * (kh - 1) - 1) // stride + 1
    ow = (w + 2 * pad - dilation * (kw - 1) - 1) // stride + 1
    xp = jnp.pad(x, ((0, 0), (pad, pad), (pad, pad), (0, 0)))
    cols = []
    for i in range(kh):
        for j in range(kw):
            hi = i * dilation
            wj = j * dilation
            cols.append(xp[:, hi:hi + stride * oh:stride, wj:wj + stride * ow:stride, :])
    patches = jnp.concatenate(cols, axis=-1)
    return patches.reshape(n * oh * ow, kh * kw * c), oh, ow


def conv_bn(x, layer, kh, kw, stride=1, pad=0, dilation=1, relu=True, residual=None):
    """x: (N,H,W,Cin) bf16; layer: {'w': (kh*kw*Cin, Cout) bf16 BN-folded, 'b': (Cout,) f32}."""
    n = x.shape[0]
    cout = layer["w"].shape[1]
    if kh == 1 and kw == 1 and pad == 0 and dilation == 1:
        xs = x[:, ::stride, ::stride, :] if stride > 1 else x
        oh, ow = xs.shape[1], xs.shape[2]
        patches = xs.reshape(n * oh * ow, xs.shape[3])
    else:
        # TODO(synk): accumulate the KHxKW taps inside the matmul kernel (shifted-slab
        #             grid axis) instead of materializing the im2col patch tensor in HBM.
        patches, oh, ow = im2col(x, kh, kw, stride, pad, dilation)

    res2d = None
    if residual is not None:
        res2d = residual.reshape(n * oh * ow, cout)

    out = fused_matmul(patches, layer["w"], layer["b"], residual=res2d, relu=relu)
    return out.reshape(n, oh, ow, cout)


# ----------------------------------------------------------------------------
# Parameter construction (mirrors ResNet.__init__ / random_init) + BN folding
# ----------------------------------------------------------------------------
class KeyGen:
    def __init__(self, seed):
        self.key = jax.random.PRNGKey(seed)

    def __call__(self):
        self.key, sub = jax.random.split(self.key)
        return sub


def conv_weight(kg, cin, cout, k):
    std = math.sqrt(2.0 / (k * k * cout))
    return std * jax.random.normal(kg(), (cout, cin, k, k), dtype=jnp.float32)


def bn_params(c):
    return dict(
        gamma=jnp.ones((c,), jnp.float32),
        beta=jnp.zeros((c,), jnp.float32),
        mean=jnp.zeros((c,), jnp.float32),
        var=jnp.ones((c,), jnp.float32),
    )


def make_resnet_params(kg, last_stride=2, layers=(3, 4, 6, 3)):
    params = {"conv1": conv_weight(kg, 3, 64, 7), "bn1": bn_params(64)}
    inplanes = 64
    stage_planes = (64, 128, 256, 512)
    stage_strides = (1, 2, 2, last_stride)
    expansion = 4
    stages = []
    for planes, blocks, stride in zip(stage_planes, layers, stage_strides):
        stage = []
        for bi in range(blocks):
            s = stride if bi == 0 else 1
            blk = {
                "conv1_w": conv_weight(kg, inplanes, planes, 1),
                "bn1": bn_params(planes),
                "conv2_w": conv_weight(kg, planes, planes, 3),
                "bn2": bn_params(planes),
                "conv3_w": conv_weight(kg, planes, planes * expansion, 1),
                "bn3": bn_params(planes * expansion),
                "stride": s,
            }
            if bi == 0 and (s != 1 or inplanes != planes * expansion):
                blk["down_w"] = conv_weight(kg, inplanes, planes * expansion, 1)
                blk["down_bn"] = bn_params(planes * expansion)
            stage.append(blk)
            inplanes = planes * expansion
        stages.append(stage)
    params["stages"] = stages
    return params


def fold_conv_bn(w, bn):
    """Fold BN affine (eval form) into a matmul-ready, bf16, pre-transposed weight."""
    cout, cin, kh, kw = w.shape
    scale = bn["gamma"] / jnp.sqrt(bn["var"] + BN_EPS)
    bias = bn["beta"] - bn["mean"] * scale
    w_mat = jnp.transpose(w, (2, 3, 1, 0)).reshape(kh * kw * cin, cout) * scale[None, :]
    return {"w": w_mat.astype(jnp.bfloat16), "b": bias.astype(jnp.float32)}


def prepare_resnet_params(raw):
    """One-time conversion of PyTorch-layout params into kernel-ready form."""
    prep = {"stem": fold_conv_bn(raw["conv1"], raw["bn1"]), "stages": []}
    for stage in raw["stages"]:
        pstage = []
        for blk in stage:
            pblk = {
                "l1": fold_conv_bn(blk["conv1_w"], blk["bn1"]),
                "l2": fold_conv_bn(blk["conv2_w"], blk["bn2"]),
                "l3": fold_conv_bn(blk["conv3_w"], blk["bn3"]),
                "stride": blk["stride"],
            }
            if "down_w" in blk:
                pblk["down"] = fold_conv_bn(blk["down_w"], blk["down_bn"])
            pstage.append(pblk)
        prep["stages"].append(pstage)
    return prep


# ----------------------------------------------------------------------------
# Forward pass (matches ResNet.forward / Bottleneck.forward)
# ----------------------------------------------------------------------------
def bottleneck_forward(x, blk):
    stride = blk["stride"]
    if "down" in blk:
        residual = conv_bn(x, blk["down"], 1, 1, stride=stride, relu=False)
    else:
        residual = x
    out = conv_bn(x, blk["l1"], 1, 1, relu=True)
    out = conv_bn(out, blk["l2"], 3, 3, stride=stride, pad=1, relu=True)
    # conv3 + BN + residual add + ReLU, all fused in the matmul epilogue.
    out = conv_bn(out, blk["l3"], 1, 1, relu=True, residual=residual)
    return out


def resnet_forward(x_nchw, params, multi=False):
    x = jnp.transpose(x_nchw, (0, 2, 3, 1)).astype(jnp.bfloat16)  # NCHW -> NHWC, bf16 activations
    x = conv_bn(x, params["stem"], 7, 7, stride=2, pad=3, relu=True)
    # MaxPool2d(kernel_size=3, stride=2, padding=1) — glue, not the hot path.
    x = jax.lax.reduce_window(
        x, jnp.array(-jnp.inf, dtype=x.dtype), jax.lax.max,
        window_dimensions=(1, 3, 3, 1),
        window_strides=(1, 2, 2, 1),
        padding=((0, 0), (1, 1), (1, 1), (0, 0)),
    )
    feats = []
    for stage in params["stages"]:
        for blk in stage:
            x = bottleneck_forward(x, blk)
        feats.append(x)
    x4 = jnp.transpose(feats[3], (0, 3, 1, 2)).astype(jnp.float32)  # back to NCHW, f32
    if not multi:
        return x4
    x3 = jnp.transpose(feats[2], (0, 3, 1, 2)).astype(jnp.float32)
    return (x4, [x3, x4])


# ----------------------------------------------------------------------------
if __name__ == "__main__":
    # Small deterministic example: batch=2, 3 input channels (forced by conv1), 64x64.
    x = jax.random.normal(jax.random.PRNGKey(0), (2, 3, 64, 64), dtype=jnp.float32)

    kg = KeyGen(0)
    raw_params = make_resnet_params(kg, last_stride=2, layers=(3, 4, 6, 3))
    params = prepare_resnet_params(raw_params)

    out = resnet_forward(x, params, multi=False)
    out = jax.block_until_ready(out)

    # 64 -> conv1/2 -> 32 -> maxpool/2 -> 16 -> layer2/2 -> 8 -> layer3/2 -> 4 -> layer4/2 -> 2
    assert out.shape == (2, 2048, 2, 2), out.shape
    assert out.dtype == jnp.float32
    assert bool(jnp.all(jnp.isfinite(out)))
    print("KERNEL_OK")
</pallas_src>

<mosaic_0001>
module attributes {stable_mosaic.version = 11 : i64} {
  func.func @_mm_kernel(%arg0: i32, %arg1: i32, %arg2: i32, %arg3: memref<512x147xbf16, #tpu.memory_space<vmem>>, %arg4: memref<147x128xbf16, #tpu.memory_space<vmem>>, %arg5: memref<1x128xf32, #tpu.memory_space<vmem>>, %arg6: memref<512x128xbf16, #tpu.memory_space<vmem>>, %arg7: memref<512x128xf32, #tpu.memory_space<vmem>>) attributes {dimension_semantics = [#tpu.dimension_semantics<parallel>, #tpu.dimension_semantics<parallel>, #tpu.dimension_semantics<arbitrary>], iteration_bounds = array<i64: 4, 1, 1>, scalar_prefetch = 0 : i64, scratch_operands = 1 : i64, tpu.core_type = #tpu.core_type<tc>, window_params = [{transform_indices = @transform_0, window_bounds = array<i64: 512, 147>}, {transform_indices = @transform_1, window_bounds = array<i64: 147, 128>}, {transform_indices = @transform_2, window_bounds = array<i64: 1, 128>}, {transform_indices = @transform_3, window_bounds = array<i64: 512, 128>}]} {
    %c0_i32 = arith.constant 0 : i32
    %0 = arith.cmpi eq, %arg2, %c0_i32 : i32
    %1 = arith.extui %0 : i1 to i32
    %c0_i32_0 = arith.constant 0 : i32
    %2 = arith.cmpi ne, %1, %c0_i32_0 : i32
    scf.if %2 {
      %cst_10 = arith.constant 0.000000e+00 : f32
      %12 = vector.broadcast %cst_10 : f32 to vector<512x128xf32>
      %c0_11 = arith.constant 0 : index
      %c0_12 = arith.constant 0 : index
      %13 = vector.load %arg7[%c0_11, %c0_12] : memref<512x128xf32, #tpu.memory_space<vmem>>, vector<512x128xf32>
      tpu.vector_store %arg7[%c0_11, %c0_12], %12 {strides = array<i32>} : memref<512x128xf32, #tpu.memory_space<vmem>>, vector<512x128xf32>,
    } else {
    }
    %c0 = arith.constant 0 : index
    %c0_1 = arith.constant 0 : index
    %3 = vector.load %arg7[%c0, %c0_1] : memref<512x128xf32, #tpu.memory_space<vmem>>, vector<512x128xf32>
    %c0_2 = arith.constant 0 : index
    %c0_3 = arith.constant 0 : index
    %4 = vector.load %arg3[%c0_2, %c0_3] : memref<512x147xbf16, #tpu.memory_space<vmem>>, vector<512x147xbf16>
    %c0_4 = arith.constant 0 : index
    %c0_5 = arith.constant 0 : index
    %5 = vector.load %arg4[%c0_4, %c0_5] : memref<147x128xbf16, #tpu.memory_space<vmem>>, vector<147x128xbf16>
    %cst = arith.constant dense<0.000000e+00> : vector<512x128xf32>
    %6 = tpu.matmul %4, %5, %cst {dimension_numbers = #tpu.dot_dimension_numbers<[1], [0], [0], [1], [0, 0, 1, 1], [], []>} : vector<512x147xbf16>, vector<147x128xbf16>, vector<512x128xf32> -> vector<512x128xf32>
    %7 = arith.addf %3, %6 : vector<512x128xf32>
    %c0_6 = arith.constant 0 : index
    %c0_7 = arith.constant 0 : index
    %8 = vector.load %arg7[%c0_6, %c0_7] : memref<512x128xf32, #tpu.memory_space<vmem>>, vector<512x128xf32>
    tpu.vector_store %arg7[%c0_6, %c0_7], %7 {strides = array<i32>} : memref<512x128xf32, #tpu.memory_space<vmem>>, vector<512x128xf32>,
    %c0_i32_8 = arith.constant 0 : i32
    %9 = arith.cmpi eq, %arg2, %c0_i32_8 : i32
    %10 = arith.extui %9 : i1 to i32
    %c0_i32_9 = arith.constant 0 : i32
    %11 = arith.cmpi ne, %10, %c0_i32_9 : i32
    scf.if %11 {
      %c0_10 = arith.constant 0 : index
      %c0_11 = arith.constant 0 : index
      %12 = vector.load %arg7[%c0_10, %c0_11] : memref<512x128xf32, #tpu.memory_space<vmem>>, vector<512x128xf32>
      %c0_12 = arith.constant 0 : index
      %c0_13 = arith.constant 0 : index
      %13 = vector.load %arg5[%c0_12, %c0_13] : memref<1x128xf32, #tpu.memory_space<vmem>>, vector<1x128xf32>
      %14 = vector.broadcast %13 : vector<1x128xf32> to vector<512x128xf32>
      %15 = arith.addf %12, %14 : vector<512x128xf32>
      %cst_14 = arith.constant 0.000000e+00 : f32
      %16 = vector.broadcast %cst_14 : f32 to vector<512x128xf32>
      %17 = arith.maximumf %15, %16 : vector<512x128xf32>
      %18 = arith.truncf %17 : vector<512x128xf32> to vector<512x128xbf16>
      %c0_15 = arith.constant 0 : index
      %c0_16 = arith.constant 0 : index
      %19 = vector.load %arg6[%c0_15, %c0_16] : memref<512x128xbf16, #tpu.memory_space<vmem>>, vector<512x128xbf16>
      tpu.vector_store %arg6[%c0_15, %c0_16], %18 {strides = array<i32>} : memref<512x128xbf16, #tpu.memory_space<vmem>>, vector<512x128xbf16>,
    } else {
    }
    return
  }
  func.func @transform_0(%arg0: i32, %arg1: i32, %arg2: i32) -> (i32, i32) {
    %c0_i32 = arith.constant 0 : i32
    return %arg0, %arg2 : i32, i32
  }
  func.func @transform_1(%arg0: i32, %arg1: i32, %arg2: i32) -> (i32, i32) {
    %c0_i32 = arith.constant 0 : i32
    return %arg2, %arg1 : i32, i32
  }
  func.func @transform_2(%arg0: i32, %arg1: i32, %arg2: i32) -> (i32, i32) {
    %c0_i32 = arith.constant 0 : i32
    %c0_i32_0 = arith.constant 0 : i32
    return %c0_i32, %arg1 : i32, i32
  }
  func.func @transform_3(%arg0: i32, %arg1: i32, %arg2: i32) -> (i32, i32) {
    %c0_i32 = arith.constant 0 : i32
    return %arg0, %arg1 : i32, i32
  }
}

</mosaic_0001>

<llo_original>
// kernel: tpu_custom_call.1
$region0: #{tpu_custom_call.1}
  #allocation0 [shape = 'u32[]', space=smem, size = 0x4, offset = 0x4, fixed_abs, tag = 'smem constant byte address 0x4 - core index']
  #allocation1 [shape = 'u32[144,128]{1,0:T(1,128)}', space=vmem, size = 0x12000, scoped, tag = 'internal scratch']
  #allocation2 [shape = 'f32[512,128]{1,0:T(8,128)}', space=vmem, size = 0x40000, scoped, tag = 'scratch operand']
  %s0 = inlined_call_operand.vmem [shape: bf16[2048,147], index: 0, kind: input, shape index: {}]
  %s1 = inlined_call_operand.vmem [shape: bf16[147,128], index: 1, kind: input, shape index: {}]
  %s2 = inlined_call_operand.vmem [shape: f32[1,128], index: 2, kind: input, shape index: {}]
  %s3 = inlined_call_operand.hbm [shape: bf16[2048,128], index: 3, kind: output, shape index: {}]
  %s4 = sld [smem:[#allocation0]]
  $region53: #{tpu_custom_call.1} parent=0
    _
  %s6 = ssub.s32 1, %s4
  %s7 = scalar_select 0, %s6, %s4
  $region1: #{tpu_custom_call.1} parent=0
    #allocation3 [shape = 'u8[262144]{0}', space=vmem, size = 0x40000, scoped, tag = 'output window, operand 0']
    #allocation4 [shape = 's32[2]{0}', space=sflag, size = 0x8, scoped, tag = 'scoped memory for tpu_custom_call.1']
    %8 = vsyncpa [#allocation4], 0
    %s9 = scalar_lea.sflag [#allocation4], 1
    %10 = vsyncpa %s9, 0
    loop: start=0, step=1, limit=6
    $region2: #{tpu_custom_call.1} parent=1 // loop_pre_header
      _
    $region3: #{tpu_custom_call.1} parent=1 // loop_header
      %s12 = sphi 0, %s16
      %p13 = scmp.ge.s32.totalorder %s12, 6
      %s19 = sphi 0, %s38
      %s20 = sphi 0, %s34
      %s21 = sphi 0, %s30
      %s22 = sphi 0, %s19
      %s23 = sphi 0, %s20
      %s24 = sphi 0, %s21
      %s25 = sphi 0, %s22
      %s26 = sphi 0, %s23
      %s27 = sphi 0, %s24
      %s43 = sphi 0, %s45
      %s46 = sphi 0, %s43
      %s47 = sphi 0, %s46
      %s63 = sphi 0, %s47
      %s71 = sphi 0, %s73
      %s74 = sphi 0, %s71
      %s75 = sphi 0, %s74
      %s91 = sphi 0, %s75
      %s97 = sphi 0, %s99
      %s100 = sphi 0, %s97
      %s101 = sphi 0, %s100
      %s117 = sphi 0, %s101
      %s125 = sphi 0, %s127
      %s128 = sphi 0, %s125
      %s129 = sphi 0, %s128
      %s145 = sphi 0, %s129
    $region4: #{tpu_custom_call.1} parent=1 // loop_header_branch
      %15 = sbr.rel (%p13) target = $region8
    $region5: #{tpu_custom_call.1} parent=1 // loop_body
      %s17 = ssub.s32 %s12, 1
      %s18 = ssub.s32 %s12, 2
      %s28 = sadd.s32 1, %s21
      %p29 = scmp.ge.s32.totalorder %s28, 1
      %s30 = scalar_select %p29, 0, %s28
      %s31 = sadd.s32 1, %s20
      %s32 = scalar_select %p29, %s31, %s20
      %p33 = scmp.ge.s32.totalorder %s32, 1
      %s34 = scalar_select %p33, 0, %s32
      %s35 = sadd.s32 1, %s19
      %s36 = scalar_select %p33, %s35, %s19
      %p37 = scmp.ge.s32.totalorder %s36, 4
      %s38 = scalar_select %p37, 0, %s36
      %s39 = ssub.s32 %s19, %s38
      %s40 = ssub.s32 %s21, %s30
      %s41 = sor.u32 %s39, %s40
      %p42 = scmp.eq.s32.totalorder %s41, 0
      %s44 = sadd.s32 %s43, 1
      %s45 = scalar_select %p42, %s43, %s44
      %p48 = pneg %p42
      %p49 = scmp.eq.s32.totalorder %s12, 3
      %p50 = por %p48, %p49
      %p51 = scmp.ne.s32.totalorder %s43, %s46
      %p52 = scmp.eq.s32.totalorder %s12, 0
      %p53 = por %p51, %p52
      %p54 = scmp.ne.s32.totalorder %s43, %s46
      %p55 = scmp.eq.s32.totalorder %s17, 3
      %p56 = por %p54, %p55
      %p57 = scmp.ne.s32.totalorder %s46, %s47
      %p58 = scmp.eq.s32.totalorder %s17, 0
      %p59 = por %p57, %p58
      %p60 = scmp.ne.s32.totalorder %s46, %s47
      %p61 = scmp.eq.s32.totalorder %s18, 3
      %p62 = por %p60, %p61
      %p64 = scmp.ne.s32.totalorder %s47, %s63
      %p65 = scmp.eq.s32.totalorder %s18, 0
      %p66 = por %p64, %p65
      %s67 = ssub.s32 %s21, %s30
      %s68 = ssub.s32 %s20, %s34
      %s69 = sor.u32 %s67, %s68
      %p70 = scmp.eq.s32.totalorder %s69, 0
      %s72 = sadd.s32 %s71, 1
      %s73 = scalar_select %p70, %s71, %s72
      %p76 = pneg %p70
      %p77 = scmp.eq.s32.totalorder %s12, 3
      %p78 = por %p76, %p77
      %p79 = scmp.ne.s32.totalorder %s71, %s74
      %p80 = scmp.eq.s32.totalorder %s12, 0
      %p81 = por %p79, %p80
      %p82 = scmp.ne.s32.totalorder %s71, %s74
      %p83 = scmp.eq.s32.totalorder %s17, 3
      %p84 = por %p82, %p83
      %p85 = scmp.ne.s32.totalorder %s74, %s75
      %p86 = scmp.eq.s32.totalorder %s17, 0
      %p87 = por %p85, %p86
      %p88 = scmp.ne.s32.totalorder %s74, %s75
      %p89 = scmp.eq.s32.totalorder %s18, 3
      %p90 = por %p88, %p89
      %p92 = scmp.ne.s32.totalorder %s75, %s91
      %p93 = scmp.eq.s32.totalorder %s18, 0
      %p94 = por %p92, %p93
      %s95 = ssub.s32 %s20, %s34
      %p96 = scmp.eq.s32.totalorder %s95, 0
      %s98 = sadd.s32 %s97, 1
      %s99 = scalar_select %p96, %s97, %s98
      %p102 = pneg %p96
      %p103 = scmp.eq.s32.totalorder %s12, 3
      %p104 = por %p102, %p103
      %p105 = scmp.ne.s32.totalorder %s97, %s100
      %p106 = scmp.eq.s32.totalorder %s12, 0
      %p107 = por %p105, %p106
      %p108 = scmp.ne.s32.totalorder %s97, %s100
      %p109 = scmp.eq.s32.totalorder %s17, 3
      %p110 = por %p108, %p109
      %p111 = scmp.ne.s32.totalorder %s100, %s101
      %p112 = scmp.eq.s32.totalorder %s17, 0
      %p113 = por %p111, %p112
      %p114 = scmp.ne.s32.totalorder %s100, %s101
      %p115 = scmp.eq.s32.totalorder %s18, 3
      %p116 = por %p114, %p115
      %p118 = scmp.ne.s32.totalorder %s101, %s117
      %p119 = scmp.eq.s32.totalorder %s18, 0
      %p120 = por %p118, %p119
      %s121 = ssub.s32 %s19, %s38
      %s122 = ssub.s32 %s20, %s34
      %s123 = sor.u32 %s121, %s122
      %p124 = scmp.eq.s32.totalorder %s123, 0
      %s126 = sadd.s32 %s125, 1
      %s127 = scalar_select %p124, %s125, %s126
      %p130 = pneg %p124
      %p131 = scmp.eq.s32.totalorder %s12, 3
      %p132 = por %p130, %p131
      %p133 = scmp.ne.s32.totalorder %s125, %s128
      %p134 = scmp.eq.s32.totalorder %s12, 0
      %p135 = por %p133, %p134
      %p136 = scmp.ne.s32.totalorder %s125, %s128
      %p137 = scmp.eq.s32.totalorder %s17, 3
      %p138 = por %p136, %p137
      %p139 = scmp.ne.s32.totalorder %s128, %s129
      %p140 = scmp.eq.s32.totalorder %s17, 0
      %p141 = por %p139, %p140
      %p142 = scmp.ne.s32.totalorder %s128, %s129
      %p143 = scmp.eq.s32.totalorder %s18, 3
      %p144 = por %p142, %p143
      %p146 = scmp.ne.s32.totalorder %s129, %s145
      %p147 = scmp.eq.s32.totalorder %s18, 0
      %p148 = por %p146, %p147
      %p149 = scmp.le.s32.totalorder 1, %s12
      %p150 = scmp.lt.s32.totalorder %s12, 5
      %p151 = pnand %p149, %p150
      %p152 = pneg %p151
      // Predicated region
      $region9: #{tpu_custom_call.1} parent=5 // pred_check
        _
      $region10: #{tpu_custom_call.1} parent=5 // pred_check_branch
        %154 = sbr.rel (%p151) target = $region12
      $region11: #{tpu_custom_call.1} parent=5 // pred_region
        %s155 = ssub.s32 %s12, 1
        // Predicated region
        $region13: #{tpu_custom_call.1} parent=11 // pred_check
          %p156 = pneg %p87
        $region14: #{tpu_custom_call.1} parent=11 // pred_check_branch
          %158 = sbr.rel (%p156) target = $region16
        $region15: #{tpu_custom_call.1} parent=11 // pred_region
          %s159 = smul.u32 19, %s24
          %p160 = scmp.lt.s32.totalorder %s159, 18
          %s161 = scalar_select %p160, %s159, 18
          %p162 = scmp.lt.s32.totalorder %s23, 0
          %s163 = scalar_select %p162, %s23, 0
          %s164 = sadd.s32 %s163, %s161
          %s165 = smul.addr %s164, 4
          %s166 = scalar_lea.vmem %s1, %s165
          %s167 = smul.u32 19, %s24
        $region16: #{tpu_custom_call.1} parent=11 // pred_fallthru
          _
        // Predicated region
        $region17: #{tpu_custom_call.1} parent=11 // pred_check
          %p168 = pneg %p113
        $region18: #{tpu_custom_call.1} parent=11 // pred_check_branch
          %170 = sbr.rel (%p168) target = $region20
        $region19: #{tpu_custom_call.1} parent=11 // pred_region
          %p171 = scmp.lt.s32.totalorder %s23, 0
          %s172 = scalar_select %p171, %s23, 0
          %s173 = scalar_lea.vmem %s2, %s172
        $region20: #{tpu_custom_call.1} parent=11 // pred_fallthru
          _
      $region12: #{tpu_custom_call.1} parent=5 // pred_fallthru
        _
      %p174 = scmp.lt.s32.totalorder %s12, 4
      // Predicated region
      $region21: #{tpu_custom_call.1} parent=5 // pred_check
        %p175 = pneg %p174
      $region22: #{tpu_custom_call.1} parent=5 // pred_check_branch
        %177 = sbr.rel (%p175) target = $region24
      $region23: #{tpu_custom_call.1} parent=5 // pred_region
        // Predicated region
        $region25: #{tpu_custom_call.1} parent=23 // pred_check
          %p178 = pneg %p53
        $region26: #{tpu_custom_call.1} parent=23 // pred_check_branch
          %180 = sbr.rel (%p178) target = $region28
        $region27: #{tpu_custom_call.1} parent=23 // pred_region
          %s181 = smul.u32 64, %s19
          %s182 = smul.u32 2, %s21
          %p183 = scmp.lt.s32.totalorder %s181, 255
          %s184 = scalar_select %p183, %s181, 255
          %p185 = scmp.lt.s32.totalorder %s182, 1
          %s186 = scalar_select %p185, %s182, 1
          %s187 = smul.addr %s184, 2
          %s188 = sadd.s32 %s186, %s187
          %s189 = smul.addr %s188, 4
          %s190 = scalar_lea.vmem %s0, %s189
          %s191 = smul.u32 64, %s19
          %s192 = smul.u32 2, %s21
        $region28: #{tpu_custom_call.1} parent=23 // pred_fallthru
          _
      $region24: #{tpu_custom_call.1} parent=5 // pred_fallthru
        _
      %p193 = scmp.le.s32.totalorder 1, %s12
      %p194 = scmp.lt.s32.totalorder %s12, 5
      %p195 = pnand %p193, %p194
      %p196 = pneg %p195
      // Predicated region
      $region29: #{tpu_custom_call.1} parent=5 // pred_check
        _
      $region30: #{tpu_custom_call.1} parent=5 // pred_check_branch
        %198 = sbr.rel (%p195) target = $region32
      $region31: #{tpu_custom_call.1} parent=5 // pred_region
        %s199 = ssub.s32 %s12, 1
        %s200 = smul.u32 64, %s22
        %s201 = smul.u32 2, %s24
        %p202 = scmp.lt.s32.totalorder %s200, 255
        %s203 = scalar_select %p202, %s200, 255
        %p204 = scmp.lt.s32.totalorder %s201, 1
        %s205 = scalar_select %p204, %s201, 1
        %s206 = smul.addr %s203, 2
        %s207 = sadd.s32 %s205, %s206
        %s208 = smul.addr %s207, 4
        %s209 = scalar_lea.vmem %s0, %s208
        %p210 = pneg %p59
        %p211 = pneg %p56
        %s212 = smul.u32 19, %s24
        %p213 = scmp.lt.s32.totalorder %s212, 18
        %s214 = scalar_select %p213, %s212, 18
        %p215 = scmp.lt.s32.totalorder %s23, 0
        %s216 = scalar_select %p215, %s23, 0
        %s217 = sadd.s32 %s216, %s214
        %s218 = smul.addr %s217, 4
        %s219 = scalar_lea.vmem %s1, %s218
        %p220 = pneg %p87
        %p221 = pneg %p84
        %p222 = scmp.lt.s32.totalorder %s23, 0
        %s223 = scalar_select %p222, %s23, 0
        %s224 = scalar_lea.vmem %s2, %s223
        %p225 = pneg %p113
        %p226 = pneg %p110
        %p227 = pneg %p141
        %p228 = pneg %p138
        %s229 = sand.u32 %s128, 1
        %s230 = scalar_lea.sflag [#allocation4], %s229
        %s231 = sand.u32 %s128, 1
        %s232 = smul.addr %s231, 256
        %s233 = scalar_lea.vmem [#allocation3], %s232
        %s234 = smul.u32 64, %s22
        %s235 = smul.u32 2, %s24
        %p236 = scmp.lt.s32.totalorder %s234, 255
        %s237 = scalar_select %p236, %s234, 255
        %p238 = scmp.lt.s32.totalorder %s235, 1
        %s239 = scalar_select %p238, %s235, 1
        %s240 = smul.addr %s237, 2
        %s241 = sadd.s32 %s239, %s240
        %s242 = smul.addr %s241, 4
        %s243 = scalar_lea.vmem %s0, %s242
        %s244 = smul.u32 64, %s22
        %s245 = smul.u32 2, %s24
        %s246 = smul.u32 19, %s24
        %p247 = scmp.lt.s32.totalorder %s246, 18
        %s248 = scalar_select %p247, %s246, 18
        %p249 = scmp.lt.s32.totalorder %s23, 0
        %s250 = scalar_select %p249, %s23, 0
        %s251 = sadd.s32 %s250, %s248
        %s252 = smul.addr %s251, 4
        %s253 = scalar_lea.vmem %s1, %s252
        %s254 = smul.u32 19, %s24
        %p255 = scmp.lt.s32.totalorder %s23, 0
        %s256 = scalar_select %p255, %s23, 0
        %s257 = scalar_lea.vmem %s2, %s256
        %s258 = smul.u32 64, %s22
        %p260 = scmp.eq.s32.totalorder %s24, 0
        // Predicated region
        $region33: #{tpu_custom_call.1} parent=31 // pred_check
          %p261 = pneg %p260
        $region34: #{tpu_custom_call.1} parent=31 // pred_check_branch
          %263 = sbr.rel (%p261) target = $region36
        $region35: #{tpu_custom_call.1} parent=31 // pred_region
          %264 = vst [vmem:[#allocation2] sm:$0xff] 0.0
          %265 = vst [vmem:[#allocation2 + $0x8] sm:$0xff] 0.0
          %266 = vst [vmem:[#allocation2 + $0x10] sm:$0xff] 0.0
          %267 = vst [vmem:[#allocation2 + $0x18] sm:$0xff] 0.0
          %268 = vst [vmem:[#allocation2 + $0x20] sm:$0xff] 0.0
          %269 = vst [vmem:[#allocation2 + $0x28] sm:$0xff] 0.0
          %270 = vst [vmem:[#allocation2 + $0x30] sm:$0xff] 0.0
          %271 = vst [vmem:[#allocation2 + $0x38] sm:$0xff] 0.0
          %272 = vst [vmem:[#allocation2 + $0x40] sm:$0xff] 0.0
          %273 = vst [vmem:[#allocation2 + $0x48] sm:$0xff] 0.0
          %274 = vst [vmem:[#allocation2 + $0x50] sm:$0xff] 0.0
          %275 = vst [vmem:[#allocation2 + $0x58] sm:$0xff] 0.0
          %276 = vst [vmem:[#allocation2 + $0x60] sm:$0xff] 0.0
          %277 = vst [vmem:[#allocation2 + $0x68] sm:$0xff] 0.0
          %278 = vst [vmem:[#allocation2 + $0x70] sm:$0xff] 0.0
          %279 = vst [vmem:[#allocation2 + $0x78] sm:$0xff] 0.0
          %280 = vst [vmem:[#allocation2 + $0x80] sm:$0xff] 0.0
          %281 = vst [vmem:[#allocation2 + $0x88] sm:$0xff] 0.0
          %282 = vst [vmem:[#allocation2 + $0x90] sm:$0xff] 0.0
          %283 = vst [vmem:[#allocation2 + $0x98] sm:$0xff] 0.0
          %284 = vst [vmem:[#allocation2 + $0xa0] sm:$0xff] 0.0
          %285 = vst [vmem:[#allocation2 + $0xa8] sm:$0xff] 0.0
          %286 = vst [vmem:[#allocation2 + $0xb0] sm:$0xff] 0.0
          %287 = vst [vmem:[#allocation2 + $0xb8] sm:$0xff] 0.0
          %288 = vst [vmem:[#allocation2 + $0xc0] sm:$0xff] 0.0
          %289 = vst [vmem:[#allocation2 + $0xc8] sm:$0xff] 0.0
          %290 = vst [vmem:[#allocation2 + $0xd0] sm:$0xff] 0.0
          %291 = vst [vmem:[#allocation2 + $0xd8] sm:$0xff] 0.0
          %292 = vst [vmem:[#allocation2 + $0xe0] sm:$0xff] 0.0
          %293 = vst [vmem:[#allocation2 + $0xe8] sm:$0xff] 0.0
          %294 = vst [vmem:[#allocation2 + $0xf0] sm:$0xff] 0.0
          %295 = vst [vmem:[#allocation2 + $0xf8] sm:$0xff] 0.0
          %296 = vst [vmem:[#allocation2 + $0x100] sm:$0xff] 0.0
          %297 = vst [vmem:[#allocation2 + $0x108] sm:$0xff] 0.0
          %298 = vst [vmem:[#allocation2 + $0x110] sm:$0xff] 0.0
          %299 = vst [vmem:[#allocation2 + $0x118] sm:$0xff] 0.0
          %300 = vst [vmem:[#allocation2 + $0x120] sm:$0xff] 0.0
          %301 = vst [vmem:[#allocation2 + $0x128] sm:$0xff] 0.0
          %302 = vst [vmem:[#allocation2 + $0x130] sm:$0xff] 0.0
          %303 = vst [vmem:[#allocation2 + $0x138] sm:$0xff] 0.0
          %304 = vst [vmem:[#allocation2 + $0x140] sm:$0xff] 0.0
          %305 = vst [vmem:[#allocation2 + $0x148] sm:$0xff] 0.0
          %306 = vst [vmem:[#allocation2 + $0x150] sm:$0xff] 0.0
          %307 = vst [vmem:[#allocation2 + $0x158] sm:$0xff] 0.0
          %308 = vst [vmem:[#allocation2 + $0x160] sm:$0xff] 0.0
          %309 = vst [vmem:[#allocation2 + $0x168] sm:$0xff] 0.0
          %310 = vst [vmem:[#allocation2 + $0x170] sm:$0xff] 0.0
          %311 = vst [vmem:[#allocation2 + $0x178] sm:$0xff] 0.0
          %312 = vst [vmem:[#allocation2 + $0x180] sm:$0xff] 0.0
          %313 = vst [vmem:[#allocation2 + $0x188] sm:$0xff] 0.0
          %314 = vst [vmem:[#allocation2 + $0x190] sm:$0xff] 0.0
          %315 = vst [vmem:[#allocation2 + $0x198] sm:$0xff] 0.0
          %316 = vst [vmem:[#allocation2 + $0x1a0] sm:$0xff] 0.0
          %317 = vst [vmem:[#allocation2 + $0x1a8] sm:$0xff] 0.0
          %318 = vst [vmem:[#allocation2 + $0x1b0] sm:$0xff] 0.0
          %319 = vst [vmem:[#allocation2 + $0x1b8] sm:$0xff] 0.0
          %320 = vst [vmem:[#allocation2 + $0x1c0] sm:$0xff] 0.0
          %321 = vst [vmem:[#allocation2 + $0x1c8] sm:$0xff] 0.0
          %322 = vst [vmem:[#allocation2 + $0x1d0] sm:$0xff] 0.0
          %323 = vst [vmem:[#allocation2 + $0x1d8] sm:$0xff] 0.0
          %324 = vst [vmem:[#allocation2 + $0x1e0] sm:$0xff] 0.0
          %325 = vst [vmem:[#allocation2 + $0x1e8] sm:$0xff] 0.0
          %326 = vst [vmem:[#allocation2 + $0x1f0] sm:$0xff] 0.0
          %327 = vst [vmem:[#allocation2 + $0x1f8] sm:$0xff] 0.0
        $region36: #{tpu_custom_call.1} parent=31 // pred_fallthru
          _
        %v328 = vld [vmem:[#allocation2] sm:$0xff]
        %v329 = vld [vmem:[#allocation2 + $0x8] sm:$0xff]
        %v330 = vld [vmem:[#allocation2 + $0x10] sm:$0xff]
        %v331 = vld [vmem:[#allocation2 + $0x18] sm:$0xff]
        %v332 = vld [vmem:[#allocation2 + $0x20] sm:$0xff]
        %v333 = vld [vmem:[#allocation2 + $0x28] sm:$0xff]
        %v334 = vld [vmem:[#allocation2 + $0x30] sm:$0xff]
        %v335 = vld [vmem:[#allocation2 + $0x38] sm:$0xff]
        %v336 = vld [vmem:[#allocation2 + $0x40] sm:$0xff]
        %v337 = vld [vmem:[#allocation2 + $0x48] sm:$0xff]
        %v338 = vld [vmem:[#allocation2 + $0x50] sm:$0xff]
        %v339 = vld [vmem:[#allocation2 + $0x58] sm:$0xff]
        %v340 = vld [vmem:[#allocation2 + $0x60] sm:$0xff]
        %v341 = vld [vmem:[#allocation2 + $0x68] sm:$0xff]
        %v342 = vld [vmem:[#allocation2 + $0x70] sm:$0xff]
        %v343 = vld [vmem:[#allocation2 + $0x78] sm:$0xff]
        %v344 = vld [vmem:[#allocation2 + $0x80] sm:$0xff]
        %v345 = vld [vmem:[#allocation2 + $0x88] sm:$0xff]
        %v346 = vld [vmem:[#allocation2 + $0x90] sm:$0xff]
        %v347 = vld [vmem:[#allocation2 + $0x98] sm:$0xff]
        %v348 = vld [vmem:[#allocation2 + $0xa0] sm:$0xff]
        %v349 = vld [vmem:[#allocation2 + $0xa8] sm:$0xff]
        %v350 = vld [vmem:[#allocation2 + $0xb0] sm:$0xff]
        %v351 = vld [vmem:[#allocation2 + $0xb8] sm:$0xff]
        %v352 = vld [vmem:[#allocation2 + $0xc0] sm:$0xff]
        %v353 = vld [vmem:[#allocation2 + $0xc8] sm:$0xff]
        %v354 = vld [vmem:[#allocation2 + $0xd0] sm:$0xff]
        %v355 = vld [vmem:[#allocation2 + $0xd8] sm:$0xff]
        %v356 = vld [vmem:[#allocation2 + $0xe0] sm:$0xff]
        %v357 = vld [vmem:[#allocation2 + $0xe8] sm:$0xff]
        %v358 = vld [vmem:[#allocation2 + $0xf0] sm:$0xff]
        %v359 = vld [vmem:[#allocation2 + $0xf8] sm:$0xff]
        %v360 = vld [vmem:[#allocation2 + $0x100] sm:$0xff]
        %v361 = vld [vmem:[#allocation2 + $0x108] sm:$0xff]
        %v362 = vld [vmem:[#allocation2 + $0x110] sm:$0xff]
        %v363 = vld [vmem:[#allocation2 + $0x118] sm:$0xff]
        %v364 = vld [vmem:[#allocation2 + $0x120] sm:$0xff]
        %v365 = vld [vmem:[#allocation2 + $0x128] sm:$0xff]
        %v366 = vld [vmem:[#allocation2 + $0x130] sm:$0xff]
        %v367 = vld [vmem:[#allocation2 + $0x138] sm:$0xff]
        %v368 = vld [vmem:[#allocation2 + $0x140] sm:$0xff]
        %v369 = vld [vmem:[#allocation2 + $0x148] sm:$0xff]
        %v370 = vld [vmem:[#allocation2 + $0x150] sm:$0xff]
        %v371 = vld [vmem:[#allocation2 + $0x158] sm:$0xff]
        %v372 = vld [vmem:[#allocation2 + $0x160] sm:$0xff]
        %v373 = vld [vmem:[#allocation2 + $0x168] sm:$0xff]
        %v374 = vld [vmem:[#allocation2 + $0x170] sm:$0xff]
        %v375 = vld [vmem:[#allocation2 + $0x178] sm:$0xff]
        %v376 = vld [vmem:[#allocation2 + $0x180] sm:$0xff]
        %v377 = vld [vmem:[#allocation2 + $0x188] sm:$0xff]
        %v378 = vld [vmem:[#allocation2 + $0x190] sm:$0xff]
        %v379 = vld [vmem:[#allocation2 + $0x198] sm:$0xff]
        %v380 = vld [vmem:[#allocation2 + $0x1a0] sm:$0xff]
        %v381 = vld [vmem:[#allocation2 + $0x1a8] sm:$0xff]
        %v382 = vld [vmem:[#allocation2 + $0x1b0] sm:$0xff]
        %v383 = vld [vmem:[#allocation2 + $0x1b8] sm:$0xff]
        %v384 = vld [vmem:[#allocation2 + $0x1c0] sm:$0xff]
        %v385 = vld [vmem:[#allocation2 + $0x1c8] sm:$0xff]
        %v386 = vld [vmem:[#allocation2 + $0x1d0] sm:$0xff]
        %v387 = vld [vmem:[#allocation2 + $0x1d8] sm:$0xff]
        %v388 = vld [vmem:[#allocation2 + $0x1e0] sm:$0xff]
        %v389 = vld [vmem:[#allocation2 + $0x1e8] sm:$0xff]
        %v390 = vld [vmem:[#allocation2 + $0x1f0] sm:$0xff]
        %v391 = vld [vmem:[#allocation2 + $0x1f8] sm:$0xff]
        %v392 = vld [vmem:[%s243] sm:$0xff]
        %v393 = vld [vmem:[%s243 + $0x8] sm:$0xff]
        %v394 = vld [vmem:[%s243 + $0x10] sm:$0xff]
        %v395 = vld [vmem:[%s243 + $0x18] sm:$0xff]
        %v396 = vld [vmem:[%s243 + $0x20] sm:$0xff]
        %v397 = vld [vmem:[%s243 + $0x28] sm:$0xff]
        %v398 = vld [vmem:[%s243 + $0x30] sm:$0xff]
        %v399 = vld [vmem:[%s243 + $0x38] sm:$0xff]
        %v400 = vld [vmem:[%s243 + $0x40] sm:$0xff]
        %v401 = vld [vmem:[%s243 + $0x48] sm:$0xff]
        %v402 = vld [vmem:[%s243 + $0x50] sm:$0xff]
        %v403 = vld [vmem:[%s243 + $0x58] sm:$0xff]
        %v404 = vld [vmem:[%s243 + $0x60] sm:$0xff]
        %v405 = vld [vmem:[%s243 + $0x68] sm:$0xff]
        %v406 = vld [vmem:[%s243 + $0x70] sm:$0xff]
        %v407 = vld [vmem:[%s243 + $0x78] sm:$0xff]
        %v408 = vld [vmem:[%s243 + $0x80] sm:$0xff]
        %v409 = vld [vmem:[%s243 + $0x88] sm:$0xff]
        %v410 = vld [vmem:[%s243 + $0x90] sm:$0xff]
        %v411 = vld [vmem:[%s243 + $0x98] sm:$0xff]
        %v412 = vld [vmem:[%s243 + $0xa0] sm:$0xff]
        %v413 = vld [vmem:[%s243 + $0xa8] sm:$0xff]
        %v414 = vld [vmem:[%s243 + $0xb0] sm:$0xff]
        %v415 = vld [vmem:[%s243 + $0xb8] sm:$0xff]
        %v416 = vld [vmem:[%s243 + $0xc0] sm:$0xff]
        %v417 = vld [vmem:[%s243 + $0xc8] sm:$0xff]
        %v418 = vld [vmem:[%s243 + $0xd0] sm:$0xff]
        %v419 = vld [vmem:[%s243 + $0xd8] sm:$0xff]
        %v420 = vld [vmem:[%s243 + $0xe0] sm:$0xff]
        %v421 = vld [vmem:[%s243 + $0xe8] sm:$0xff]
        %v422 = vld [vmem:[%s243 + $0xf0] sm:$0xff]
        %v423 = vld [vmem:[%s243 + $0xf8] sm:$0xff]
        %v424 = vld [vmem:[%s243 + $0x100] sm:$0xff]
        %v425 = vld [vmem:[%s243 + $0x108] sm:$0xff]
        %v426 = vld [vmem:[%s243 + $0x110] sm:$0xff]
        %v427 = vld [vmem:[%s243 + $0x118] sm:$0xff]
        %v428 = vld [vmem:[%s243 + $0x120] sm:$0xff]
        %v429 = vld [vmem:[%s243 + $0x128] sm:$0xff]
        %v430 = vld [vmem:[%s243 + $0x130] sm:$0xff]
        %v431 = vld [vmem:[%s243 + $0x138] sm:$0xff]
        %v432 = vld [vmem:[%s243 + $0x140] sm:$0xff]
        %v433 = vld [vmem:[%s243 + $0x148] sm:$0xff]
        %v434 = vld [vmem:[%s243 + $0x150] sm:$0xff]
        %v435 = vld [vmem:[%s243 + $0x158] sm:$0xff]
        %v436 = vld [vmem:[%s243 + $0x160] sm:$0xff]
        %v437 = vld [vmem:[%s243 + $0x168] sm:$0xff]
        %v438 = vld [vmem:[%s243 + $0x170] sm:$0xff]
        %v439 = vld [vmem:[%s243 + $0x178] sm:$0xff]
        %v440 = vld [vmem:[%s243 + $0x180] sm:$0xff]
        %v441 = vld [vmem:[%s243 + $0x188] sm:$0xff]
        %v442 = vld [vmem:[%s243 + $0x190] sm:$0xff]
        %v443 = vld [vmem:[%s243 + $0x198] sm:$0xff]
        %v444 = vld [vmem:[%s243 + $0x1a0] sm:$0xff]
        %v445 = vld [vmem:[%s243 + $0x1a8] sm:$0xff]
        %v446 = vld [vmem:[%s243 + $0x1b0] sm:$0xff]
        %v447 = vld [vmem:[%s243 + $0x1b8] sm:$0xff]
        %v448 = vld [vmem:[%s243 + $0x1c0] sm:$0xff]
        %v449 = vld [vmem:[%s243 + $0x1c8] sm:$0xff]
        %v450 = vld [vmem:[%s243 + $0x1d0] sm:$0xff]
        %v451 = vld [vmem:[%s243 + $0x1d8] sm:$0xff]
        %v452 = vld [vmem:[%s243 + $0x1e0] sm:$0xff]
        %v453 = vld [vmem:[%s243 + $0x1e8] sm:$0xff]
        %v454 = vld [vmem:[%s243 + $0x1f0] sm:$0xff]
        %v455 = vld [vmem:[%s243 + $0x1f8] sm:$0xff]
        %v456 = vld [vmem:[%s253] sm:$0xf]
        %v457 = vld [vmem:[%s253 + $0x4] sm:$0xf]
        %v458 = vld [vmem:[%s253 + $0x8] sm:$0xf]
        %v459 = vld [vmem:[%s253 + $0xc] sm:$0xf]
        %v460 = vld [vmem:[%s253 + $0x10] sm:$0xf]
        %v461 = vld [vmem:[%s253 + $0x14] sm:$0xf]
        %v462 = vld [vmem:[%s253 + $0x18] sm:$0xf]
        %v463 = vld [vmem:[%s253 + $0x1c] sm:$0xf]
        %v464 = vld [vmem:[%s253 + $0x20] sm:$0xf]
        %v465 = vld [vmem:[%s253 + $0x24] sm:$0xf]
        %v466 = vld [vmem:[%s253 + $0x28] sm:$0xf]
        %v467 = vld [vmem:[%s253 + $0x2c] sm:$0xf]
        %v468 = vld [vmem:[%s253 + $0x30] sm:$0xf]
        %v469 = vld [vmem:[%s253 + $0x34] sm:$0xf]
        %v470 = vld [vmem:[%s253 + $0x38] sm:$0xf]
        %v471 = vld [vmem:[%s253 + $0x3c] sm:$0xf]
        %v472 = vld [vmem:[%s253 + $0x40] sm:$0xf]
        %v473 = vld [vmem:[%s253 + $0x44] sm:$0xf]
        %v474 = vld [vmem:[%s253 + $0x48] sm:$0x3]
        %v539 = vunpack.c.l.b16 %v392
        %v540 = vunpack.c.h.b16 %v392
        %v541 = vunpack.c.l.b16 %v393
        %v542 = vunpack.c.h.b16 %v393
        %v543 = vunpack.c.l.b16 %v394
        %v544 = vunpack.c.h.b16 %v394
        %v545 = vunpack.c.l.b16 %v395
        %v546 = vunpack.c.h.b16 %v395
        %v547 = vunpack.c.l.b16 %v396
        %v548 = vunpack.c.h.b16 %v396
        %v549 = vunpack.c.l.b16 %v397
        %v550 = vunpack.c.h.b16 %v397
        %v551 = vunpack.c.l.b16 %v398
        %v552 = vunpack.c.h.b16 %v398
        %v553 = vunpack.c.l.b16 %v399
        %v554 = vunpack.c.h.b16 %v399
        %v555 = vunpack.c.l.b16 %v400
        %v556 = vunpack.c.h.b16 %v400
        %v557 = vunpack.c.l.b16 %v401
        %v558 = vunpack.c.h.b16 %v401
        %v559 = vunpack.c.l.b16 %v402
        %v560 = vunpack.c.h.b16 %v402
        %v561 = vunpack.c.l.b16 %v403
        %v562 = vunpack.c.h.b16 %v403
        %v563 = vunpack.c.l.b16 %v404
        %v564 = vunpack.c.h.b16 %v404
        %v565 = vunpack.c.l.b16 %v405
        %v566 = vunpack.c.h.b16 %v405
        %v567 = vunpack.c.l.b16 %v406
        %v568 = vunpack.c.h.b16 %v406
        %v569 = vunpack.c.l.b16 %v407
        %v570 = vunpack.c.h.b16 %v407
        %v571 = vunpack.c.l.b16 %v408
        %v572 = vunpack.c.h.b16 %v408
        %v573 = vunpack.c.l.b16 %v409
        %v574 = vunpack.c.h.b16 %v409
        %v575 = vunpack.c.l.b16 %v410
        %v576 = vunpack.c.h.b16 %v410
        %v577 = vunpack.c.l.b16 %v411
        %v578 = vunpack.c.h.b16 %v411
        %v579 = vunpack.c.l.b16 %v412
        %v580 = vunpack.c.h.b16 %v412
        %v581 = vunpack.c.l.b16 %v413
        %v582 = vunpack.c.h.b16 %v413
        %v583 = vunpack.c.l.b16 %v414
        %v584 = vunpack.c.h.b16 %v414
        %v585 = vunpack.c.l.b16 %v415
        %v586 = vunpack.c.h.b16 %v415
        %v587 = vunpack.c.l.b16 %v416
        %v588 = vunpack.c.h.b16 %v416
        %v589 = vunpack.c.l.b16 %v417
        %v590 = vunpack.c.h.b16 %v417
        %v591 = vunpack.c.l.b16 %v418
        %v592 = vunpack.c.h.b16 %v418
        %v593 = vunpack.c.l.b16 %v419
        %v594 = vunpack.c.h.b16 %v419
        %v595 = vunpack.c.l.b16 %v420
        %v596 = vunpack.c.h.b16 %v420
        %v597 = vunpack.c.l.b16 %v421
        %v598 = vunpack.c.h.b16 %v421
        %v599 = vunpack.c.l.b16 %v422
        %v600 = vunpack.c.h.b16 %v422
        %v601 = vunpack.c.l.b16 %v423
        %v602 = vunpack.c.h.b16 %v423
        %v603 = vunpack.c.l.b16 %v424
        %v604 = vunpack.c.h.b16 %v424
        %v605 = vunpack.c.l.b16 %v425
        %v606 = vunpack.c.h.b16 %v425
        %v607 = vunpack.c.l.b16 %v426
        %v608 = vunpack.c.h.b16 %v426
        %v609 = vunpack.c.l.b16 %v427
        %v610 = vunpack.c.h.b16 %v427
        %v611 = vunpack.c.l.b16 %v428
        %v612 = vunpack.c.h.b16 %v428
        %v613 = vunpack.c.l.b16 %v429
        %v614 = vunpack.c.h.b16 %v429
        %v615 = vunpack.c.l.b16 %v430
        %v616 = vunpack.c.h.b16 %v430
        %v617 = vunpack.c.l.b16 %v431
        %v618 = vunpack.c.h.b16 %v431
        %v619 = vunpack.c.l.b16 %v432
        %v620 = vunpack.c.h.b16 %v432
        %v621 = vunpack.c.l.b16 %v433
        %v622 = vunpack.c.h.b16 %v433
        %v623 = vunpack.c.l.b16 %v434
        %v624 = vunpack.c.h.b16 %v434
        %v625 = vunpack.c.l.b16 %v435
        %v626 = vunpack.c.h.b16 %v435
        %v627 = vunpack.c.l.b16 %v436
        %v628 = vunpack.c.h.b16 %v436
        %v629 = vunpack.c.l.b16 %v437
        %v630 = vunpack.c.h.b16 %v437
        %v631 = vunpack.c.l.b16 %v438
        %v632 = vunpack.c.h.b16 %v438
        %v633 = vunpack.c.l.b16 %v439
        %v634 = vunpack.c.h.b16 %v439
        %v635 = vunpack.c.l.b16 %v440
        %v636 = vunpack.c.h.b16 %v440
        %v637 = vunpack.c.l.b16 %v441
        %v638 = vunpack.c.h.b16 %v441
        %v639 = vunpack.c.l.b16 %v442
        %v640 = vunpack.c.h.b16 %v442
        %v641 = vunpack.c.l.b16 %v443
        %v642 = vunpack.c.h.b16 %v443
        %v643 = vunpack.c.l.b16 %v444
        %v644 = vunpack.c.h.b16 %v444
        %v645 = vunpack.c.l.b16 %v445
        %v646 = vunpack.c.h.b16 %v445
        %v647 = vunpack.c.l.b16 %v446
        %v648 = vunpack.c.h.b16 %v446
        %v649 = vunpack.c.l.b16 %v447
        %v650 = vunpack.c.h.b16 %v447
        %v651 = vunpack.c.l.b16 %v448
        %v652 = vunpack.c.h.b16 %v448
        %v653 = vunpack.c.l.b16 %v449
        %v654 = vunpack.c.h.b16 %v449
        %v655 = vunpack.c.l.b16 %v450
        %v656 = vunpack.c.h.b16 %v450
        %v657 = vunpack.c.l.b16 %v451
        %v658 = vunpack.c.h.b16 %v451
        %v659 = vunpack.c.l.b16 %v452
        %v660 = vunpack.c.h.b16 %v452
        %v661 = vunpack.c.l.b16 %v453
        %v662 = vunpack.c.h.b16 %v453
        %v663 = vunpack.c.l.b16 %v454
        %v664 = vunpack.c.h.b16 %v454
        %v665 = vunpack.c.l.b16 %v455
        %v666 = vunpack.c.h.b16 %v455
        %v667 = vpack.c.b16 %v541, %v539
        %v668 = vpack.c.b16 %v542, %v540
        %v669 = vpack.c.b16 %v545, %v543
        %v670 = vpack.c.b16 %v546, %v544
        %v671 = vpack.c.b16 %v549, %v547
        %v672 = vpack.c.b16 %v550, %v548
        %v673 = vpack.c.b16 %v553, %v551
        %v674 = vpack.c.b16 %v554, %v552
        %v675 = vpack.c.b16 %v557, %v555
        %v676 = vpack.c.b16 %v558, %v556
        %v677 = vpack.c.b16 %v561, %v559
        %v678 = vpack.c.b16 %v562, %v560
        %v679 = vpack.c.b16 %v565, %v563
        %v680 = vpack.c.b16 %v566, %v564
        %v681 = vpack.c.b16 %v569, %v567
        %v682 = vpack.c.b16 %v570, %v568
        %v683 = vpack.c.b16 %v573, %v571
        %v684 = vpack.c.b16 %v574, %v572
        %v685 = vpack.c.b16 %v577, %v575
        %v686 = vpack.c.b16 %v578, %v576
        %v687 = vpack.c.b16 %v581, %v579
        %v688 = vpack.c.b16 %v582, %v580
        %v689 = vpack.c.b16 %v585, %v583
        %v690 = vpack.c.b16 %v586, %v584
        %v691 = vpack.c.b16 %v589, %v587
        %v692 = vpack.c.b16 %v590, %v588
        %v693 = vpack.c.b16 %v593, %v591
        %v694 = vpack.c.b16 %v594, %v592
        %v695 = vpack.c.b16 %v597, %v595
        %v696 = vpack.c.b16 %v598, %v596
        %v697 = vpack.c.b16 %v601, %v599
        %v698 = vpack.c.b16 %v602, %v600
        %v699 = vpack.c.b16 %v605, %v603
        %v700 = vpack.c.b16 %v606, %v604
        %v701 = vpack.c.b16 %v609, %v607
        %v702 = vpack.c.b16 %v610, %v608
        %v703 = vpack.c.b16 %v613, %v611
        %v704 = vpack.c.b16 %v614, %v612
        %v705 = vpack.c.b16 %v617, %v615
        %v706 = vpack.c.b16 %v618, %v616
        %v707 = vpack.c.b16 %v621, %v619
        %v708 = vpack.c.b16 %v622, %v620
        %v709 = vpack.c.b16 %v625, %v623
        %v710 = vpack.c.b16 %v626, %v624
        %v711 = vpack.c.b16 %v629, %v627
        %v712 = vpack.c.b16 %v630, %v628
        %v713 = vpack.c.b16 %v633, %v631
        %v714 = vpack.c.b16 %v634, %v632
        %v715 = vpack.c.b16 %v637, %v635
        %v716 = vpack.c.b16 %v638, %v636
        %v717 = vpack.c.b16 %v641, %v639
        %v718 = vpack.c.b16 %v642, %v640
        %v719 = vpack.c.b16 %v645, %v643
        %v720 = vpack.c.b16 %v646, %v644
        %v721 = vpack.c.b16 %v649, %v647
        %v722 = vpack.c.b16 %v650, %v648
        %v723 = vpack.c.b16 %v653, %v651
        %v724 = vpack.c.b16 %v654, %v652
        %v725 = vpack.c.b16 %v657, %v655
        %v726 = vpack.c.b16 %v658, %v656
        %v727 = vpack.c.b16 %v661, %v659
        %v728 = vpack.c.b16 %v662, %v660
        %v729 = vpack.c.b16 %v665, %v663
        %v730 = vpack.c.b16 %v666, %v664
        %v782 = vunpack.c.l.b16 %v456
        %v783 = vunpack.c.l.b16 %v457
        %v784 = vunpack.c.l.b16 %v458
        %v785 = vunpack.c.l.b16 %v459
        %v786 = vunpack.c.l.b16 %v460
        %v787 = vunpack.c.l.b16 %v461
        %v788 = vunpack.c.l.b16 %v462
        %v789 = vunpack.c.l.b16 %v463
        %v790 = vunpack.c.l.b16 %v464
        %v791 = vunpack.c.l.b16 %v465
        %v792 = vunpack.c.l.b16 %v466
        %v793 = vunpack.c.l.b16 %v467
        %v794 = vunpack.c.l.b16 %v468
        %v795 = vunpack.c.l.b16 %v469
        %v796 = vunpack.c.l.b16 %v470
        %v797 = vunpack.c.l.b16 %v471
        %v798 = vunpack.c.l.b16 %v472
        %v799 = vunpack.c.l.b16 %v473
        %v800 = vunpack.c.l.b16 %v474
        %v801 = vpack.c.b16 %v783, %v782
        %v802 = vpack.c.b16 %v785, %v784
        %v803 = vpack.c.b16 %v787, %v786
        %v804 = vpack.c.b16 %v789, %v788
        %v805 = vpack.c.b16 %v791, %v790
        %v806 = vpack.c.b16 %v793, %v792
        %v807 = vpack.c.b16 %v795, %v794
        %v808 = vpack.c.b16 %v797, %v796
        %v809 = vpack.c.b16 %v799, %v798
        %v810 = vpack.c.b16 %v800, %v800
        %vm820 = vcmask 154624
        %v822 = vsel %vm820, %v668, 0
        %v825 = vsel %vm820, %v670, 0
        %v828 = vsel %vm820, %v672, 0
        %v831 = vsel %vm820, %v674, 0
        %v834 = vsel %vm820, %v676, 0
        %v837 = vsel %vm820, %v678, 0
        %v840 = vsel %vm820, %v680, 0
        %v843 = vsel %vm820, %v682, 0
        %v846 = vsel %vm820, %v684, 0
        %v849 = vsel %vm820, %v686, 0
        %v852 = vsel %vm820, %v688, 0
        %v855 = vsel %vm820, %v690, 0
        %v858 = vsel %vm820, %v692, 0
        %v861 = vsel %vm820, %v694, 0
        %v864 = vsel %vm820, %v696, 0
        %v867 = vsel %vm820, %v698, 0
        %v870 = vsel %vm820, %v700, 0
        %v873 = vsel %vm820, %v702, 0
        %v876 = vsel %vm820, %v704, 0
        %v879 = vsel %vm820, %v706, 0
        %v882 = vsel %vm820, %v708, 0
        %v885 = vsel %vm820, %v710, 0
        %v888 = vsel %vm820, %v712, 0
        %v891 = vsel %vm820, %v714, 0
        %v894 = vsel %vm820, %v716, 0
        %v897 = vsel %vm820, %v718, 0
        %v900 = vsel %vm820, %v720, 0
        %v903 = vsel %vm820, %v722, 0
        %v906 = vsel %vm820, %v724, 0
        %v909 = vsel %vm820, %v726, 0
        %v912 = vsel %vm820, %v728, 0
        %v915 = vsel %vm820, %v730, 0
        %vm917 = vcmask 1040384
        %vm918 = vcmask 1041408
        %v919 = vsel %vm917, 4294967295, 65535
        %v920 = vsel %vm918, %v919, 0
        %v922 = vand.u32 %v810, %v920
        %924 = vmatprep.subr.bf16.mxu0 0
        %925 = vmatpush1.bf16.msra.mxu0 %v808
        %926 = vmatprep.subr.bf16.mxu0 0
        %927 = vmatpush1.bf16.msra.mxu0 %v807
        %928 = vmatprep.subr.bf16.mxu0 0
        %929 = vmatpush1.bf16.msra.mxu0 %v806
        %930 = vmatprep.subr.bf16.mxu0 0
        %931 = vmatpush1.bf16.msra.mxu0 %v805
        %932 = vmatprep.subr.bf16.mxu0 0
        %933 = vmatpush1.bf16.msra.mxu0 %v804
        %934 = vmatprep.subr.bf16.mxu0 0
        %935 = vmatpush1.bf16.msra.mxu0 %v803
        %936 = vmatprep.subr.bf16.mxu0 0
        %937 = vmatpush1.bf16.msra.mxu0 %v802
        %938 = vmatprep.subr.bf16.mxu0 0
        %939 = vmatpush1.bf16.msra.mxu0 %v801
        %940 = vmatprep.subr.bf16.mxu0 0
        %941 = vmatpush2.bf16.msra.mxu0 0
        %942 = vmatprep.subr.bf16.mxu0 0
        %943 = vmatpush2.bf16.msra.mxu0 0
        %944 = vmatprep.subr.bf16.mxu0 0
        %945 = vmatpush2.bf16.msra.mxu0 0
        %946 = vmatprep.subr.bf16.mxu0 0
        %947 = vmatpush2.bf16.msra.mxu0 0
        %948 = vmatprep.subr.bf16.mxu0 0
        %949 = vmatpush2.bf16.msra.mxu0 0
        %950 = vmatprep.subr.bf16.mxu0 0
        %951 = vmatpush2.bf16.msra.mxu0 0
        %952 = vmatprep.subr.bf16.mxu0 0
        %953 = vmatpush2.bf16.msra.mxu0 %v922
        %954 = vmatprep.subr.bf16.mxu0 0
        %955 = vmatpush2.bf16.msra.mxu0 %v809
        %956 = vmatprep.mubr.bf16.mxu0 %v822
        %957 = vmatmul.mubr.bf16.gmra.mxu0 %v667
        %v958 = vpop.f32.mrf.mxu0
        %v959 = vadd.f32 0.0, %v958
        %v960 = vpop.f32.mrf.mxu0
        %v961 = vpop.f32.mrf.mxu0
        %v962 = vadd.f32 0.0, %v961
        %v963 = vpop.f32.mrf.mxu0
        %964 = vmatprep.mubr.bf16.mxu0 %v825
        %965 = vmatmul.mubr.bf16.gmra.mxu0 %v669
        %v966 = vpop.f32.mrf.mxu0
        %v967 = vadd.f32 0.0, %v966
        %v968 = vpop.f32.mrf.mxu0
        %v969 = vpop.f32.mrf.mxu0
        %v970 = vadd.f32 0.0, %v969
        %v971 = vpop.f32.mrf.mxu0
        %972 = vmatprep.mubr.bf16.mxu0 %v828
        %973 = vmatmul.mubr.bf16.gmra.mxu0 %v671
        %v974 = vpop.f32.mrf.mxu0
        %v975 = vadd.f32 0.0, %v974
        %v976 = vpop.f32.mrf.mxu0
        %v977 = vpop.f32.mrf.mxu0
        %v978 = vadd.f32 0.0, %v977
        %v979 = vpop.f32.mrf.mxu0
        %980 = vmatprep.mubr.bf16.mxu0 %v831
        %981 = vmatmul.mubr.bf16.gmra.mxu0 %v673
        %v982 = vpop.f32.mrf.mxu0
        %v983 = vadd.f32 0.0, %v982
        %v984 = vpop.f32.mrf.mxu0
        %v985 = vpop.f32.mrf.mxu0
        %v986 = vadd.f32 0.0, %v985
        %v987 = vpop.f32.mrf.mxu0
        %988 = vmatprep.mubr.bf16.mxu0 %v834
        %989 = vmatmul.mubr.bf16.gmra.mxu0 %v675
        %v990 = vpop.f32.mrf.mxu0
        %v991 = vadd.f32 0.0, %v990
        %v992 = vpop.f32.mrf.mxu0
        %v993 = vpop.f32.mrf.mxu0
        %v994 = vadd.f32 0.0, %v993
        %v995 = vpop.f32.mrf.mxu0
        %996 = vmatprep.mubr.bf16.mxu0 %v837
        %997 = vmatmul.mubr.bf16.gmra.mxu0 %v677
        %v998 = vpop.f32.mrf.mxu0
        %v999 = vadd.f32 0.0, %v998
        %v1000 = vpop.f32.mrf.mxu0
        %v1001 = vpop.f32.mrf.mxu0
        %v1002 = vadd.f32 0.0, %v1001
        %v1003 = vpop.f32.mrf.mxu0
        %1004 = vmatprep.mubr.bf16.mxu0 %v840
        %1005 = vmatmul.mubr.bf16.gmra.mxu0 %v679
        %v1006 = vpop.f32.mrf.mxu0
        %v1007 = vadd.f32 0.0, %v1006
        %v1008 = vpop.f32.mrf.mxu0
        %v1009 = vpop.f32.mrf.mxu0
        %v1010 = vadd.f32 0.0, %v1009
        %v1011 = vpop.f32.mrf.mxu0
        %1012 = vmatprep.mubr.bf16.mxu0 %v843
        %1013 = vmatmul.mubr.bf16.gmra.mxu0 %v681
        %v1014 = vpop.f32.mrf.mxu0
        %v1015 = vadd.f32 0.0, %v1014
        %v1016 = vpop.f32.mrf.mxu0
        %v1017 = vpop.f32.mrf.mxu0
        %v1018 = vadd.f32 0.0, %v1017
        %v1019 = vpop.f32.mrf.mxu0
        %1020 = vmatprep.mubr.bf16.mxu0 %v846
        %1021 = vmatmul.mubr.bf16.gmra.mxu0 %v683
        %v1022 = vpop.f32.mrf.mxu0
        %v1023 = vadd.f32 0.0, %v1022
        %v1024 = vpop.f32.mrf.mxu0
        %v1025 = vpop.f32.mrf.mxu0
        %v1026 = vadd.f32 0.0, %v1025
        %v1027 = vpop.f32.mrf.mxu0
        %1028 = vmatprep.mubr.bf16.mxu0 %v849
        %1029 = vmatmul.mubr.bf16.gmra.mxu0 %v685
        %v1030 = vpop.f32.mrf.mxu0
        %v1031 = vadd.f32 0.0, %v1030
        %v1032 = vpop.f32.mrf.mxu0
        %v1033 = vpop.f32.mrf.mxu0
        %v1034 = vadd.f32 0.0, %v1033
        %v1035 = vpop.f32.mrf.mxu0
        %1036 = vmatprep.mubr.bf16.mxu0 %v852
        %1037 = vmatmul.mubr.bf16.gmra.mxu0 %v687
        %v1038 = vpop.f32.mrf.mxu0
        %v1039 = vadd.f32 0.0, %v1038
        %v1040 = vpop.f32.mrf.mxu0
        %v1041 = vpop.f32.mrf.mxu0
        %v1042 = vadd.f32 0.0, %v1041
        %v1043 = vpop.f32.mrf.mxu0
        %1044 = vmatprep.mubr.bf16.mxu0 %v855
        %1045 = vmatmul.mubr.bf16.gmra.mxu0 %v689
        %v1046 = vpop.f32.mrf.mxu0
        %v1047 = vadd.f32 0.0, %v1046
        %v1048 = vpop.f32.mrf.mxu0
        %v1049 = vpop.f32.mrf.mxu0
        %v1050 = vadd.f32 0.0, %v1049
        %v1051 = vpop.f32.mrf.mxu0
        %1052 = vmatprep.mubr.bf16.mxu0 %v858
        %1053 = vmatmul.mubr.bf16.gmra.mxu0 %v691
        %v1054 = vpop.f32.mrf.mxu0
        %v1055 = vadd.f32 0.0, %v1054
        %v1056 = vpop.f32.mrf.mxu0
        %v1057 = vpop.f32.mrf.mxu0
        %v1058 = vadd.f32 0.0, %v1057
        %v1059 = vpop.f32.mrf.mxu0
        %1060 = vmatprep.mubr.bf16.mxu0 %v861
        %1061 = vmatmul.mubr.bf16.gmra.mxu0 %v693
        %v1062 = vpop.f32.mrf.mxu0
        %v1063 = vadd.f32 0.0, %v1062
        %v1064 = vpop.f32.mrf.mxu0
        %v1065 = vpop.f32.mrf.mxu0
        %v1066 = vadd.f32 0.0, %v1065
        %v1067 = vpop.f32.mrf.mxu0
        %1068 = vmatprep.mubr.bf16.mxu0 %v864
        %1069 = vmatmul.mubr.bf16.gmra.mxu0 %v695
        %v1070 = vpop.f32.mrf.mxu0
        %v1071 = vadd.f32 0.0, %v1070
        %v1072 = vpop.f32.mrf.mxu0
        %v1073 = vpop.f32.mrf.mxu0
        %v1074 = vadd.f32 0.0, %v1073
        %v1075 = vpop.f32.mrf.mxu0
        %1076 = vmatprep.mubr.bf16.mxu0 %v867
        %1077 = vmatmul.mubr.bf16.gmra.mxu0 %v697
        %v1078 = vpop.f32.mrf.mxu0
        %v1079 = vadd.f32 0.0, %v1078
        %v1080 = vpop.f32.mrf.mxu0
        %v1081 = vpop.f32.mrf.mxu0
        %v1082 = vadd.f32 0.0, %v1081
        %v1083 = vpop.f32.mrf.mxu0
        %1084 = vmatprep.mubr.bf16.mxu0 %v870
        %1085 = vmatmul.mubr.bf16.gmra.mxu0 %v699
        %v1086 = vpop.f32.mrf.mxu0
        %v1087 = vadd.f32 0.0, %v1086
        %v1088 = vpop.f32.mrf.mxu0
        %v1089 = vpop.f32.mrf.mxu0
        %v1090 = vadd.f32 0.0, %v1089
        %v1091 = vpop.f32.mrf.mxu0
        %1092 = vmatprep.mubr.bf16.mxu0 %v873
        %1093 = vmatmul.mubr.bf16.gmra.mxu0 %v701
        %v1094 = vpop.f32.mrf.mxu0
        %v1095 = vadd.f32 0.0, %v1094
        %v1096 = vpop.f32.mrf.mxu0
        %v1097 = vpop.f32.mrf.mxu0
        %v1098 = vadd.f32 0.0, %v1097
        %v1099 = vpop.f32.mrf.mxu0
        %1100 = vmatprep.mubr.bf16.mxu0 %v876
        %1101 = vmatmul.mubr.bf16.gmra.mxu0 %v703
        %v1102 = vpop.f32.mrf.mxu0
        %v1103 = vadd.f32 0.0, %v1102
        %v1104 = vpop.f32.mrf.mxu0
        %v1105 = vpop.f32.mrf.mxu0
        %v1106 = vadd.f32 0.0, %v1105
        %v1107 = vpop.f32.mrf.mxu0
        %1108 = vmatprep.mubr.bf16.mxu0 %v879
        %1109 = vmatmul.mubr.bf16.gmra.mxu0 %v705
        %v1110 = vpop.f32.mrf.mxu0
        %v1111 = vadd.f32 0.0, %v1110
        %v1112 = vpop.f32.mrf.mxu0
        %v1113 = vpop.f32.mrf.mxu0
        %v1114 = vadd.f32 0.0, %v1113
        %v1115 = vpop.f32.mrf.mxu0
        %1116 = vmatprep.mubr.bf16.mxu0 %v882
        %1117 = vmatmul.mubr.bf16.gmra.mxu0 %v707
        %v1118 = vpop.f32.mrf.mxu0
        %v1119 = vadd.f32 0.0, %v1118
        %v1120 = vpop.f32.mrf.mxu0
        %v1121 = vpop.f32.mrf.mxu0
        %v1122 = vadd.f32 0.0, %v1121
        %v1123 = vpop.f32.mrf.mxu0
        %1124 = vmatprep.mubr.bf16.mxu0 %v885
        %1125 = vmatmul.mubr.bf16.gmra.mxu0 %v709
        %v1126 = vpop.f32.mrf.mxu0
        %v1127 = vadd.f32 0.0, %v1126
        %v1128 = vpop.f32.mrf.mxu0
        %v1129 = vpop.f32.mrf.mxu0
        %v1130 = vadd.f32 0.0, %v1129
        %v1131 = vpop.f32.mrf.mxu0
        %1132 = vmatprep.mubr.bf16.mxu0 %v888
        %1133 = vmatmul.mubr.bf16.gmra.mxu0 %v711
        %v1134 = vpop.f32.mrf.mxu0
        %v1135 = vadd.f32 0.0, %v1134
        %v1136 = vpop.f32.mrf.mxu0
        %v1137 = vpop.f32.mrf.mxu0
        %v1138 = vadd.f32 0.0, %v1137
        %v1139 = vpop.f32.mrf.mxu0
        %1140 = vmatprep.mubr.bf16.mxu0 %v891
        %1141 = vmatmul.mubr.bf16.gmra.mxu0 %v713
        %v1142 = vpop.f32.mrf.mxu0
        %v1143 = vadd.f32 0.0, %v1142
        %v1144 = vpop.f32.mrf.mxu0
        %v1145 = vpop.f32.mrf.mxu0
        %v1146 = vadd.f32 0.0, %v1145
        %v1147 = vpop.f32.mrf.mxu0
        %1148 = vmatprep.mubr.bf16.mxu0 %v894
        %1149 = vmatmul.mubr.bf16.gmra.mxu0 %v715
        %v1150 = vpop.f32.mrf.mxu0
        %v1151 = vadd.f32 0.0, %v1150
        %v1152 = vpop.f32.mrf.mxu0
        %v1153 = vpop.f32.mrf.mxu0
        %v1154 = vadd.f32 0.0, %v1153
        %v1155 = vpop.f32.mrf.mxu0
        %1156 = vmatprep.mubr.bf16.mxu0 %v897
        %1157 = vmatmul.mubr.bf16.gmra.mxu0 %v717
        %v1158 = vpop.f32.mrf.mxu0
        %v1159 = vadd.f32 0.0, %v1158
        %v1160 = vpop.f32.mrf.mxu0
        %v1161 = vpop.f32.mrf.mxu0
        %v1162 = vadd.f32 0.0, %v1161
        %v1163 = vpop.f32.mrf.mxu0
        %1164 = vmatprep.mubr.bf16.mxu0 %v900
        %1165 = vmatmul.mubr.bf16.gmra.mxu0 %v719
        %v1166 = vpop.f32.mrf.mxu0
        %v1167 = vadd.f32 0.0, %v1166
        %v1168 = vpop.f32.mrf.mxu0
        %v1169 = vpop.f32.mrf.mxu0
        %v1170 = vadd.f32 0.0, %v1169
        %v1171 = vpop.f32.mrf.mxu0
        %1172 = vmatprep.mubr.bf16.mxu0 %v903
        %1173 = vmatmul.mubr.bf16.gmra.mxu0 %v721
        %v1174 = vpop.f32.mrf.mxu0
        %v1175 = vadd.f32 0.0, %v1174
        %v1176 = vpop.f32.mrf.mxu0
        %v1177 = vpop.f32.mrf.mxu0
        %v1178 = vadd.f32 0.0, %v1177
        %v1179 = vpop.f32.mrf.mxu0
        %1180 = vmatprep.mubr.bf16.mxu0 %v906
        %1181 = vmatmul.mubr.bf16.gmra.mxu0 %v723
        %v1182 = vpop.f32.mrf.mxu0
        %v1183 = vadd.f32 0.0, %v1182
        %v1184 = vpop.f32.mrf.mxu0
        %v1185 = vpop.f32.mrf.mxu0
        %v1186 = vadd.f32 0.0, %v1185
        %v1187 = vpop.f32.mrf.mxu0
        %1188 = vmatprep.mubr.bf16.mxu0 %v909
        %1189 = vmatmul.mubr.bf16.gmra.mxu0 %v725
        %v1190 = vpop.f32.mrf.mxu0
        %v1191 = vadd.f32 0.0, %v1190
        %v1192 = vpop.f32.mrf.mxu0
        %v1193 = vpop.f32.mrf.mxu0
        %v1194 = vadd.f32 0.0, %v1193
        %v1195 = vpop.f32.mrf.mxu0
        %1196 = vmatprep.mubr.bf16.mxu0 %v912
        %1197 = vmatmul.mubr.bf16.gmra.mxu0 %v727
        %v1198 = vpop.f32.mrf.mxu0
        %v1199 = vadd.f32 0.0, %v1198
        %v1200 = vpop.f32.mrf.mxu0
        %v1201 = vpop.f32.mrf.mxu0
        %v1202 = vadd.f32 0.0, %v1201
        %v1203 = vpop.f32.mrf.mxu0
        %1204 = vmatprep.mubr.bf16.mxu0 %v915
        %1205 = vmatmul.mubr.bf16.gmra.mxu0 %v729
        %v1206 = vpop.f32.mrf.mxu0
        %v1207 = vadd.f32 0.0, %v1206
        %v1208 = vpop.f32.mrf.mxu0
        %v1209 = vpop.f32.mrf.mxu0
        %v1210 = vadd.f32 0.0, %v1209
        %v1211 = vpop.f32.mrf.mxu0
        %1212 = vdwg.mxu0
        %v1213 = vadd.f32 %v328, %v959
        %v1214 = vadd.f32 %v329, %v962
        %v1215 = vadd.f32 %v330, %v967
        %v1216 = vadd.f32 %v331, %v970
        %v1217 = vadd.f32 %v332, %v975
        %v1218 = vadd.f32 %v333, %v978
        %v1219 = vadd.f32 %v334, %v983
        %v1220 = vadd.f32 %v335, %v986
        %v1221 = vadd.f32 %v336, %v991
        %v1222 = vadd.f32 %v337, %v994
        %v1223 = vadd.f32 %v338, %v999
        %v1224 = vadd.f32 %v339, %v1002
        %v1225 = vadd.f32 %v340, %v1007
        %v1226 = vadd.f32 %v341, %v1010
        %v1227 = vadd.f32 %v342, %v1015
        %v1228 = vadd.f32 %v343, %v1018
        %v1229 = vadd.f32 %v344, %v1023
        %v1230 = vadd.f32 %v345, %v1026
        %v1231 = vadd.f32 %v346, %v1031
        %v1232 = vadd.f32 %v347, %v1034
        %v1233 = vadd.f32 %v348, %v1039
        %v1234 = vadd.f32 %v349, %v1042
        %v1235 = vadd.f32 %v350, %v1047
        %v1236 = vadd.f32 %v351, %v1050
        %v1237 = vadd.f32 %v352, %v1055
        %v1238 = vadd.f32 %v353, %v1058
        %v1239 = vadd.f32 %v354, %v1063
        %v1240 = vadd.f32 %v355, %v1066
        %v1241 = vadd.f32 %v356, %v1071
        %v1242 = vadd.f32 %v357, %v1074
        %v1243 = vadd.f32 %v358, %v1079
        %v1244 = vadd.f32 %v359, %v1082
        %v1245 = vadd.f32 %v360, %v1087
        %v1246 = vadd.f32 %v361, %v1090
        %v1247 = vadd.f32 %v362, %v1095
        %v1248 = vadd.f32 %v363, %v1098
        %v1249 = vadd.f32 %v364, %v1103
        %v1250 = vadd.f32 %v365, %v1106
        %v1251 = vadd.f32 %v366, %v1111
        %v1252 = vadd.f32 %v367, %v1114
        %v1253 = vadd.f32 %v368, %v1119
        %v1254 = vadd.f32 %v369, %v1122
        %v1255 = vadd.f32 %v370, %v1127
        %v1256 = vadd.f32 %v371, %v1130
        %v1257 = vadd.f32 %v372, %v1135
        %v1258 = vadd.f32 %v373, %v1138
        %v1259 = vadd.f32 %v374, %v1143
        %v1260 = vadd.f32 %v375, %v1146
        %v1261 = vadd.f32 %v376, %v1151
        %v1262 = vadd.f32 %v377, %v1154
        %v1263 = vadd.f32 %v378, %v1159
        %v1264 = vadd.f32 %v379, %v1162
        %v1265 = vadd.f32 %v380, %v1167
        %v1266 = vadd.f32 %v381, %v1170
        %v1267 = vadd.f32 %v382, %v1175
        %v1268 = vadd.f32 %v383, %v1178
        %v1269 = vadd.f32 %v384, %v1183
        %v1270 = vadd.f32 %v385, %v1186
        %v1271 = vadd.f32 %v386, %v1191
        %v1272 = vadd.f32 %v387, %v1194
        %v1273 = vadd.f32 %v388, %v1199
        %v1274 = vadd.f32 %v389, %v1202
        %v1275 = vadd.f32 %v390, %v1207
        %v1276 = vadd.f32 %v391, %v1210
        %1277 = vst [vmem:[#allocation2] sm:$0xff] %v1213
        %1278 = vst [vmem:[#allocation2 + $0x8] sm:$0xff] %v1214
        %1279 = vst [vmem:[#allocation2 + $0x10] sm:$0xff] %v1215
        %1280 = vst [vmem:[#allocation2 + $0x18] sm:$0xff] %v1216
        %1281 = vst [vmem:[#allocation2 + $0x20] sm:$0xff] %v1217
        %1282 = vst [vmem:[#allocation2 + $0x28] sm:$0xff] %v1218
        %1283 = vst [vmem:[#allocation2 + $0x30] sm:$0xff] %v1219
        %1284 = vst [vmem:[#allocation2 + $0x38] sm:$0xff] %v1220
        %1285 = vst [vmem:[#allocation2 + $0x40] sm:$0xff] %v1221
        %1286 = vst [vmem:[#allocation2 + $0x48] sm:$0xff] %v1222
        %1287 = vst [vmem:[#allocation2 + $0x50] sm:$0xff] %v1223
        %1288 = vst [vmem:[#allocation2 + $0x58] sm:$0xff] %v1224
        %1289 = vst [vmem:[#allocation2 + $0x60] sm:$0xff] %v1225
        %1290 = vst [vmem:[#allocation2 + $0x68] sm:$0xff] %v1226
        %1291 = vst [vmem:[#allocation2 + $0x70] sm:$0xff] %v1227
        %1292 = vst [vmem:[#allocation2 + $0x78] sm:$0xff] %v1228
        %1293 = vst [vmem:[#allocation2 + $0x80] sm:$0xff] %v1229
        %1294 = vst [vmem:[#allocation2 + $0x88] sm:$0xff] %v1230
        %1295 = vst [vmem:[#allocation2 + $0x90] sm:$0xff] %v1231
        %1296 = vst [vmem:[#allocation2 + $0x98] sm:$0xff] %v1232
        %1297 = vst [vmem:[#allocation2 + $0xa0] sm:$0xff] %v1233
        %1298 = vst [vmem:[#allocation2 + $0xa8] sm:$0xff] %v1234
        %1299 = vst [vmem:[#allocation2 + $0xb0] sm:$0xff] %v1235
        %1300 = vst [vmem:[#allocation2 + $0xb8] sm:$0xff] %v1236
        %1301 = vst [vmem:[#allocation2 + $0xc0] sm:$0xff] %v1237
        %1302 = vst [vmem:[#allocation2 + $0xc8] sm:$0xff] %v1238
        %1303 = vst [vmem:[#allocation2 + $0xd0] sm:$0xff] %v1239
        %1304 = vst [vmem:[#allocation2 + $0xd8] sm:$0xff] %v1240
        %1305 = vst [vmem:[#allocation2 + $0xe0] sm:$0xff] %v1241
        %1306 = vst [vmem:[#allocation2 + $0xe8] sm:$0xff] %v1242
        %1307 = vst [vmem:[#allocation2 + $0xf0] sm:$0xff] %v1243
        %1308 = vst [vmem:[#allocation2 + $0xf8] sm:$0xff] %v1244
        %1309 = vst [vmem:[#allocation2 + $0x100] sm:$0xff] %v1245
        %1310 = vst [vmem:[#allocation2 + $0x108] sm:$0xff] %v1246
        %1311 = vst [vmem:[#allocation2 + $0x110] sm:$0xff] %v1247
        %1312 = vst [vmem:[#allocation2 + $0x118] sm:$0xff] %v1248
        %1313 = vst [vmem:[#allocation2 + $0x120] sm:$0xff] %v1249
        %1314 = vst [vmem:[#allocation2 + $0x128] sm:$0xff] %v1250
        %1315 = vst [vmem:[#allocation2 + $0x130] sm:$0xff] %v1251
        %1316 = vst [vmem:[#allocation2 + $0x138] sm:$0xff] %v1252
        %1317 = vst [vmem:[#allocation2 + $0x140] sm:$0xff] %v1253
        %1318 = vst [vmem:[#allocation2 + $0x148] sm:$0xff] %v1254
        %1319 = vst [vmem:[#allocation2 + $0x150] sm:$0xff] %v1255
        %1320 = vst [vmem:[#allocation2 + $0x158] sm:$0xff] %v1256
        %1321 = vst [vmem:[#allocation2 + $0x160] sm:$0xff] %v1257
        %1322 = vst [vmem:[#allocation2 + $0x168] sm:$0xff] %v1258
        %1323 = vst [vmem:[#allocation2 + $0x170] sm:$0xff] %v1259
        %1324 = vst [vmem:[#allocation2 + $0x178] sm:$0xff] %v1260
        %1325 = vst [vmem:[#allocation2 + $0x180] sm:$0xff] %v1261
        %1326 = vst [vmem:[#allocation2 + $0x188] sm:$0xff] %v1262
        %1327 = vst [vmem:[#allocation2 + $0x190] sm:$0xff] %v1263
        %1328 = vst [vmem:[#allocation2 + $0x198] sm:$0xff] %v1264
        %1329 = vst [vmem:[#allocation2 + $0x1a0] sm:$0xff] %v1265
        %1330 = vst [vmem:[#allocation2 + $0x1a8] sm:$0xff] %v1266
        %1331 = vst [vmem:[#allocation2 + $0x1b0] sm:$0xff] %v1267
        %1332 = vst [vmem:[#allocation2 + $0x1b8] sm:$0xff] %v1268
        %1333 = vst [vmem:[#allocation2 + $0x1c0] sm:$0xff] %v1269
        %1334 = vst [vmem:[#allocation2 + $0x1c8] sm:$0xff] %v1270
        %1335 = vst [vmem:[#allocation2 + $0x1d0] sm:$0xff] %v1271
        %1336 = vst [vmem:[#allocation2 + $0x1d8] sm:$0xff] %v1272
        %1337 = vst [vmem:[#allocation2 + $0x1e0] sm:$0xff] %v1273
        %1338 = vst [vmem:[#allocation2 + $0x1e8] sm:$0xff] %v1274
        %1339 = vst [vmem:[#allocation2 + $0x1f0] sm:$0xff] %v1275
        %1340 = vst [vmem:[#allocation2 + $0x1f8] sm:$0xff] %v1276
        // Predicated region
        $region37: #{tpu_custom_call.1} parent=31 // pred_check
          %p1341 = pneg %p260
        $region38: #{tpu_custom_call.1} parent=31 // pred_check_branch
          %1343 = sbr.rel (%p1341) target = $region40
        $region39: #{tpu_custom_call.1} parent=31 // pred_region
          %v1344 = vld [vmem:[#allocation2] sm:$0xff]
          %v1345 = vld [vmem:[#allocation2 + $0x8] sm:$0xff]
          %v1346 = vld [vmem:[#allocation2 + $0x10] sm:$0xff]
          %v1347 = vld [vmem:[#allocation2 + $0x18] sm:$0xff]
          %v1348 = vld [vmem:[#allocation2 + $0x20] sm:$0xff]
          %v1349 = vld [vmem:[#allocation2 + $0x28] sm:$0xff]
          %v1350 = vld [vmem:[#allocation2 + $0x30] sm:$0xff]
          %v1351 = vld [vmem:[#allocation2 + $0x38] sm:$0xff]
          %v1352 = vld [vmem:[#allocation2 + $0x40] sm:$0xff]
          %v1353 = vld [vmem:[#allocation2 + $0x48] sm:$0xff]
          %v1354 = vld [vmem:[#allocation2 + $0x50] sm:$0xff]
          %v1355 = vld [vmem:[#allocation2 + $0x58] sm:$0xff]
          %v1356 = vld [vmem:[#allocation2 + $0x60] sm:$0xff]
          %v1357 = vld [vmem:[#allocation2 + $0x68] sm:$0xff]
          %v1358 = vld [vmem:[#allocation2 + $0x70] sm:$0xff]
          %v1359 = vld [vmem:[#allocation2 + $0x78] sm:$0xff]
          %v1360 = vld [vmem:[#allocation2 + $0x80] sm:$0xff]
          %v1361 = vld [vmem:[#allocation2 + $0x88] sm:$0xff]
          %v1362 = vld [vmem:[#allocation2 + $0x90] sm:$0xff]
          %v1363 = vld [vmem:[#allocation2 + $0x98] sm:$0xff]
          %v1364 = vld [vmem:[#allocation2 + $0xa0] sm:$0xff]
          %v1365 = vld [vmem:[#allocation2 + $0xa8] sm:$0xff]
          %v1366 = vld [vmem:[#allocation2 + $0xb0] sm:$0xff]
          %v1367 = vld [vmem:[#allocation2 + $0xb8] sm:$0xff]
          %v1368 = vld [vmem:[#allocation2 + $0xc0] sm:$0xff]
          %v1369 = vld [vmem:[#allocation2 + $0xc8] sm:$0xff]
          %v1370 = vld [vmem:[#allocation2 + $0xd0] sm:$0xff]
          %v1371 = vld [vmem:[#allocation2 + $0xd8] sm:$0xff]
          %v1372 = vld [vmem:[#allocation2 + $0xe0] sm:$0xff]
          %v1373 = vld [vmem:[#allocation2 + $0xe8] sm:$0xff]
          %v1374 = vld [vmem:[#allocation2 + $0xf0] sm:$0xff]
          %v1375 = vld [vmem:[#allocation2 + $0xf8] sm:$0xff]
          %v1376 = vld [vmem:[#allocation2 + $0x100] sm:$0xff]
          %v1377 = vld [vmem:[#allocation2 + $0x108] sm:$0xff]
          %v1378 = vld [vmem:[#allocation2 + $0x110] sm:$0xff]
          %v1379 = vld [vmem:[#allocation2 + $0x118] sm:$0xff]
          %v1380 = vld [vmem:[#allocation2 + $0x120] sm:$0xff]
          %v1381 = vld [vmem:[#allocation2 + $0x128] sm:$0xff]
          %v1382 = vld [vmem:[#allocation2 + $0x130] sm:$0xff]
          %v1383 = vld [vmem:[#allocation2 + $0x138] sm:$0xff]
          %v1384 = vld [vmem:[#allocation2 + $0x140] sm:$0xff]
          %v1385 = vld [vmem:[#allocation2 + $0x148] sm:$0xff]
          %v1386 = vld [vmem:[#allocation2 + $0x150] sm:$0xff]
          %v1387 = vld [vmem:[#allocation2 + $0x158] sm:$0xff]
          %v1388 = vld [vmem:[#allocation2 + $0x160] sm:$0xff]
          %v1389 = vld [vmem:[#allocation2 + $0x168] sm:$0xff]
          %v1390 = vld [vmem:[#allocation2 + $0x170] sm:$0xff]
          %v1391 = vld [vmem:[#allocation2 + $0x178] sm:$0xff]
          %v1392 = vld [vmem:[#allocation2 + $0x180] sm:$0xff]
          %v1393 = vld [vmem:[#allocation2 + $0x188] sm:$0xff]
          %v1394 = vld [vmem:[#allocation2 + $0x190] sm:$0xff]
          %v1395 = vld [vmem:[#allocation2 + $0x198] sm:$0xff]
          %v1396 = vld [vmem:[#allocation2 + $0x1a0] sm:$0xff]
          %v1397 = vld [vmem:[#allocation2 + $0x1a8] sm:$0xff]
          %v1398 = vld [vmem:[#allocation2 + $0x1b0] sm:$0xff]
          %v1399 = vld [vmem:[#allocation2 + $0x1b8] sm:$0xff]
          %v1400 = vld [vmem:[#allocation2 + $0x1c0] sm:$0xff]
          %v1401 = vld [vmem:[#allocation2 + $0x1c8] sm:$0xff]
          %v1402 = vld [vmem:[#allocation2 + $0x1d0] sm:$0xff]
          %v1403 = vld [vmem:[#allocation2 + $0x1d8] sm:$0xff]
          %v1404 = vld [vmem:[#allocation2 + $0x1e0] sm:$0xff]
          %v1405 = vld [vmem:[#allocation2 + $0x1e8] sm:$0xff]
          %v1406 = vld [vmem:[#allocation2 + $0x1f0] sm:$0xff]
          %v1407 = vld [vmem:[#allocation2 + $0x1f8] sm:$0xff]
          %v1408 = vld [vmem:[%s257] sm:$0x1]
          %v1410 = vlaneseq
          %v1411 = vshrl.u32 %v1410, 7
          %v1412 = vsub.s32 0, %v1411
          %v1413 = vrot.slane %v1408, %v1412
          %v1415 = vadd.f32 %v1344, %v1413
          %v1416 = vadd.f32 %v1345, %v1413
          %v1417 = vadd.f32 %v1346, %v1413
          %v1418 = vadd.f32 %v1347, %v1413
          %v1419 = vadd.f32 %v1348, %v1413
          %v1420 = vadd.f32 %v1349, %v1413
          %v1421 = vadd.f32 %v1350, %v1413
          %v1422 = vadd.f32 %v1351, %v1413
          %v1423 = vadd.f32 %v1352, %v1413
          %v1424 = vadd.f32 %v1353, %v1413
          %v1425 = vadd.f32 %v1354, %v1413
          %v1426 = vadd.f32 %v1355, %v1413
          %v1427 = vadd.f32 %v1356, %v1413
          %v1428 = vadd.f32 %v1357, %v1413
          %v1429 = vadd.f32 %v1358, %v1413
          %v1430 = vadd.f32 %v1359, %v1413
          %v1431 = vadd.f32 %v1360, %v1413
          %v1432 = vadd.f32 %v1361, %v1413
          %v1433 = vadd.f32 %v1362, %v1413
          %v1434 = vadd.f32 %v1363, %v1413
          %v1435 = vadd.f32 %v1364, %v1413
          %v1436 = vadd.f32 %v1365, %v1413
          %v1437 = vadd.f32 %v1366, %v1413
          %v1438 = vadd.f32 %v1367, %v1413
          %v1439 = vadd.f32 %v1368, %v1413
          %v1440 = vadd.f32 %v1369, %v1413
          %v1441 = vadd.f32 %v1370, %v1413
          %v1442 = vadd.f32 %v1371, %v1413
          %v1443 = vadd.f32 %v1372, %v1413
          %v1444 = vadd.f32 %v1373, %v1413
          %v1445 = vadd.f32 %v1374, %v1413
          %v1446 = vadd.f32 %v1375, %v1413
          %v1447 = vadd.f32 %v1376, %v1413
          %v1448 = vadd.f32 %v1377, %v1413
          %v1449 = vadd.f32 %v1378, %v1413
          %v1450 = vadd.f32 %v1379, %v1413
          %v1451 = vadd.f32 %v1380, %v1413
          %v1452 = vadd.f32 %v1381, %v1413
          %v1453 = vadd.f32 %v1382, %v1413
          %v1454 = vadd.f32 %v1383, %v1413
          %v1455 = vadd.f32 %v1384, %v1413
          %v1456 = vadd.f32 %v1385, %v1413
          %v1457 = vadd.f32 %v1386, %v1413
          %v1458 = vadd.f32 %v1387, %v1413
          %v1459 = vadd.f32 %v1388, %v1413
          %v1460 = vadd.f32 %v1389, %v1413
          %v1461 = vadd.f32 %v1390, %v1413
          %v1462 = vadd.f32 %v1391, %v1413
          %v1463 = vadd.f32 %v1392, %v1413
          %v1464 = vadd.f32 %v1393, %v1413
          %v1465 = vadd.f32 %v1394, %v1413
          %v1466 = vadd.f32 %v1395, %v1413
          %v1467 = vadd.f32 %v1396, %v1413
          %v1468 = vadd.f32 %v1397, %v1413
          %v1469 = vadd.f32 %v1398, %v1413
          %v1470 = vadd.f32 %v1399, %v1413
          %v1471 = vadd.f32 %v1400, %v1413
          %v1472 = vadd.f32 %v1401, %v1413
          %v1473 = vadd.f32 %v1402, %v1413
          %v1474 = vadd.f32 %v1403, %v1413
          %v1475 = vadd.f32 %v1404, %v1413
          %v1476 = vadd.f32 %v1405, %v1413
          %v1477 = vadd.f32 %v1406, %v1413
          %v1478 = vadd.f32 %v1407, %v1413
          %v1479 = vmax.f32 %v1415, 0.0
          %v1480 = vmax.f32 %v1416, 0.0
          %v1481 = vmax.f32 %v1417, 0.0
          %v1482 = vmax.f32 %v1418, 0.0
          %v1483 = vmax.f32 %v1419, 0.0
          %v1484 = vmax.f32 %v1420, 0.0
          %v1485 = vmax.f32 %v1421, 0.0
          %v1486 = vmax.f32 %v1422, 0.0
          %v1487 = vmax.f32 %v1423, 0.0
          %v1488 = vmax.f32 %v1424, 0.0
          %v1489 = vmax.f32 %v1425, 0.0
          %v1490 = vmax.f32 %v1426, 0.0
          %v1491 = vmax.f32 %v1427, 0.0
          %v1492 = vmax.f32 %v1428, 0.0
          %v1493 = vmax.f32 %v1429, 0.0
          %v1494 = vmax.f32 %v1430, 0.0
          %v1495 = vmax.f32 %v1431, 0.0
          %v1496 = vmax.f32 %v1432, 0.0
          %v1497 = vmax.f32 %v1433, 0.0
          %v1498 = vmax.f32 %v1434, 0.0
          %v1499 = vmax.f32 %v1435, 0.0
          %v1500 = vmax.f32 %v1436, 0.0
          %v1501 = vmax.f32 %v1437, 0.0
          %v1502 = vmax.f32 %v1438, 0.0
          %v1503 = vmax.f32 %v1439, 0.0
          %v1504 = vmax.f32 %v1440, 0.0
          %v1505 = vmax.f32 %v1441, 0.0
          %v1506 = vmax.f32 %v1442, 0.0
          %v1507 = vmax.f32 %v1443, 0.0
          %v1508 = vmax.f32 %v1444, 0.0
          %v1509 = vmax.f32 %v1445, 0.0
          %v1510 = vmax.f32 %v1446, 0.0
          %v1511 = vmax.f32 %v1447, 0.0
          %v1512 = vmax.f32 %v1448, 0.0
          %v1513 = vmax.f32 %v1449, 0.0
          %v1514 = vmax.f32 %v1450, 0.0
          %v1515 = vmax.f32 %v1451, 0.0
          %v1516 = vmax.f32 %v1452, 0.0
          %v1517 = vmax.f32 %v1453, 0.0
          %v1518 = vmax.f32 %v1454, 0.0
          %v1519 = vmax.f32 %v1455, 0.0
          %v1520 = vmax.f32 %v1456, 0.0
          %v1521 = vmax.f32 %v1457, 0.0
          %v1522 = vmax.f32 %v1458, 0.0
          %v1523 = vmax.f32 %v1459, 0.0
          %v1524 = vmax.f32 %v1460, 0.0
          %v1525 = vmax.f32 %v1461, 0.0
          %v1526 = vmax.f32 %v1462, 0.0
          %v1527 = vmax.f32 %v1463, 0.0
          %v1528 = vmax.f32 %v1464, 0.0
          %v1529 = vmax.f32 %v1465, 0.0
          %v1530 = vmax.f32 %v1466, 0.0
          %v1531 = vmax.f32 %v1467, 0.0
          %v1532 = vmax.f32 %v1468, 0.0
          %v1533 = vmax.f32 %v1469, 0.0
          %v1534 = vmax.f32 %v1470, 0.0
          %v1535 = vmax.f32 %v1471, 0.0
          %v1536 = vmax.f32 %v1472, 0.0
          %v1537 = vmax.f32 %v1473, 0.0
          %v1538 = vmax.f32 %v1474, 0.0
          %v1539 = vmax.f32 %v1475, 0.0
          %v1540 = vmax.f32 %v1476, 0.0
          %v1541 = vmax.f32 %v1477, 0.0
          %v1542 = vmax.f32 %v1478, 0.0
          %v1543 = vpack.c.bf16 %v1480, %v1479
          %v1544 = vpack.c.bf16 %v1482, %v1481
          %v1545 = vpack.c.bf16 %v1484, %v1483
          %v1546 = vpack.c.bf16 %v1486, %v1485
          %v1547 = vpack.c.bf16 %v1488, %v1487
          %v1548 = vpack.c.bf16 %v1490, %v1489
          %v1549 = vpack.c.bf16 %v1492, %v1491
          %v1550 = vpack.c.bf16 %v1494, %v1493
          %v1551 = vpack.c.bf16 %v1496, %v1495
          %v1552 = vpack.c.bf16 %v1498, %v1497
          %v1553 = vpack.c.bf16 %v1500, %v1499
          %v1554 = vpack.c.bf16 %v1502, %v1501
          %v1555 = vpack.c.bf16 %v1504, %v1503
          %v1556 = vpack.c.bf16 %v1506, %v1505
          %v1557 = vpack.c.bf16 %v1508, %v1507
          %v1558 = vpack.c.bf16 %v1510, %v1509
          %v1559 = vpack.c.bf16 %v1512, %v1511
          %v1560 = vpack.c.bf16 %v1514, %v1513
          %v1561 = vpack.c.bf16 %v1516, %v1515
          %v1562 = vpack.c.bf16 %v1518, %v1517
          %v1563 = vpack.c.bf16 %v1520, %v1519
          %v1564 = vpack.c.bf16 %v1522, %v1521
          %v1565 = vpack.c.bf16 %v1524, %v1523
          %v1566 = vpack.c.bf16 %v1526, %v1525
          %v1567 = vpack.c.bf16 %v1528, %v1527
          %v1568 = vpack.c.bf16 %v1530, %v1529
          %v1569 = vpack.c.bf16 %v1532, %v1531
          %v1570 = vpack.c.bf16 %v1534, %v1533
          %v1571 = vpack.c.bf16 %v1536, %v1535
          %v1572 = vpack.c.bf16 %v1538, %v1537
          %v1573 = vpack.c.bf16 %v1540, %v1539
          %v1574 = vpack.c.bf16 %v1542, %v1541
          %v1607 = vunpack.c.l.b16 %v1543
          %v1608 = vunpack.c.h.b16 %v1543
          %v1609 = vunpack.c.l.b16 %v1544
          %v1610 = vunpack.c.h.b16 %v1544
          %v1611 = vunpack.c.l.b16 %v1545
          %v1612 = vunpack.c.h.b16 %v1545
          %v1613 = vunpack.c.l.b16 %v1546
          %v1614 = vunpack.c.h.b16 %v1546
          %v1615 = vunpack.c.l.b16 %v1547
          %v1616 = vunpack.c.h.b16 %v1547
          %v1617 = vunpack.c.l.b16 %v1548
          %v1618 = vunpack.c.h.b16 %v1548
          %v1619 = vunpack.c.l.b16 %v1549
          %v1620 = vunpack.c.h.b16 %v1549
          %v1621 = vunpack.c.l.b16 %v1550
          %v1622 = vunpack.c.h.b16 %v1550
          %v1623 = vunpack.c.l.b16 %v1551
          %v1624 = vunpack.c.h.b16 %v1551
          %v1625 = vunpack.c.l.b16 %v1552
          %v1626 = vunpack.c.h.b16 %v1552
          %v1627 = vunpack.c.l.b16 %v1553
          %v1628 = vunpack.c.h.b16 %v1553
          %v1629 = vunpack.c.l.b16 %v1554
          %v1630 = vunpack.c.h.b16 %v1554
          %v1631 = vunpack.c.l.b16 %v1555
          %v1632 = vunpack.c.h.b16 %v1555
          %v1633 = vunpack.c.l.b16 %v1556
          %v1634 = vunpack.c.h.b16 %v1556
          %v1635 = vunpack.c.l.b16 %v1557
          %v1636 = vunpack.c.h.b16 %v1557
          %v1637 = vunpack.c.l.b16 %v1558
          %v1638 = vunpack.c.h.b16 %v1558
          %v1639 = vunpack.c.l.b16 %v1559
          %v1640 = vunpack.c.h.b16 %v1559
          %v1641 = vunpack.c.l.b16 %v1560
          %v1642 = vunpack.c.h.b16 %v1560
          %v1643 = vunpack.c.l.b16 %v1561
          %v1644 = vunpack.c.h.b16 %v1561
          %v1645 = vunpack.c.l.b16 %v1562
          %v1646 = vunpack.c.h.b16 %v1562
          %v1647 = vunpack.c.l.b16 %v1563
          %v1648 = vunpack.c.h.b16 %v1563
          %v1649 = vunpack.c.l.b16 %v1564
          %v1650 = vunpack.c.h.b16 %v1564
          %v1651 = vunpack.c.l.b16 %v1565
          %v1652 = vunpack.c.h.b16 %v1565
          %v1653 = vunpack.c.l.b16 %v1566
          %v1654 = vunpack.c.h.b16 %v1566
          %v1655 = vunpack.c.l.b16 %v1567
          %v1656 = vunpack.c.h.b16 %v1567
          %v1657 = vunpack.c.l.b16 %v1568
          %v1658 = vunpack.c.h.b16 %v1568
          %v1659 = vunpack.c.l.b16 %v1569
          %v1660 = vunpack.c.h.b16 %v1569
          %v1661 = vunpack.c.l.b16 %v1570
          %v1662 = vunpack.c.h.b16 %v1570
          %v1663 = vunpack.c.l.b16 %v1571
          %v1664 = vunpack.c.h.b16 %v1571
          %v1665 = vunpack.c.l.b16 %v1572
          %v1666 = vunpack.c.h.b16 %v1572
          %v1667 = vunpack.c.l.b16 %v1573
          %v1668 = vunpack.c.h.b16 %v1573
          %v1669 = vunpack.c.l.b16 %v1574
          %v1670 = vunpack.c.h.b16 %v1574
          %v1671 = vpack.c.b16 %v1607, %v1607
          %v1672 = vpack.c.b16 %v1608, %v1608
          %v1673 = vpack.c.b16 %v1609, %v1609
          %v1674 = vpack.c.b16 %v1610, %v1610
          %v1675 = vpack.c.b16 %v1611, %v1611
          %v1676 = vpack.c.b16 %v1612, %v1612
          %v1677 = vpack.c.b16 %v1613, %v1613
          %v1678 = vpack.c.b16 %v1614, %v1614
          %v1679 = vpack.c.b16 %v1615, %v1615
          %v1680 = vpack.c.b16 %v1616, %v1616
          %v1681 = vpack.c.b16 %v1617, %v1617
          %v1682 = vpack.c.b16 %v1618, %v1618
          %v1683 = vpack.c.b16 %v1619, %v1619
          %v1684 = vpack.c.b16 %v1620, %v1620
          %v1685 = vpack.c.b16 %v1621, %v1621
          %v1686 = vpack.c.b16 %v1622, %v1622
          %v1687 = vpack.c.b16 %v1623, %v1623
          %v1688 = vpack.c.b16 %v1624, %v1624
          %v1689 = vpack.c.b16 %v1625, %v1625
          %v1690 = vpack.c.b16 %v1626, %v1626
          %v1691 = vpack.c.b16 %v1627, %v1627
          %v1692 = vpack.c.b16 %v1628, %v1628
          %v1693 = vpack.c.b16 %v1629, %v1629
          %v1694 = vpack.c.b16 %v1630, %v1630
          %v1695 = vpack.c.b16 %v1631, %v1631
          %v1696 = vpack.c.b16 %v1632, %v1632
          %v1697 = vpack.c.b16 %v1633, %v1633
          %v1698 = vpack.c.b16 %v1634, %v1634
          %v1699 = vpack.c.b16 %v1635, %v1635
          %v1700 = vpack.c.b16 %v1636, %v1636
          %v1701 = vpack.c.b16 %v1637, %v1637
          %v1702 = vpack.c.b16 %v1638, %v1638
          %v1703 = vpack.c.b16 %v1639, %v1639
          %v1704 = vpack.c.b16 %v1640, %v1640
          %v1705 = vpack.c.b16 %v1641, %v1641
          %v1706 = vpack.c.b16 %v1642, %v1642
          %v1707 = vpack.c.b16 %v1643, %v1643
          %v1708 = vpack.c.b16 %v1644, %v1644
          %v1709 = vpack.c.b16 %v1645, %v1645
          %v1710 = vpack.c.b16 %v1646, %v1646
          %v1711 = vpack.c.b16 %v1647, %v1647
          %v1712 = vpack.c.b16 %v1648, %v1648
          %v1713 = vpack.c.b16 %v1649, %v1649
          %v1714 = vpack.c.b16 %v1650, %v1650
          %v1715 = vpack.c.b16 %v1651, %v1651
          %v1716 = vpack.c.b16 %v1652, %v1652
          %v1717 = vpack.c.b16 %v1653, %v1653
          %v1718 = vpack.c.b16 %v1654, %v1654
          %v1719 = vpack.c.b16 %v1655, %v1655
          %v1720 = vpack.c.b16 %v1656, %v1656
          %v1721 = vpack.c.b16 %v1657, %v1657
          %v1722 = vpack.c.b16 %v1658, %v1658
          %v1723 = vpack.c.b16 %v1659, %v1659
          %v1724 = vpack.c.b16 %v1660, %v1660
          %v1725 = vpack.c.b16 %v1661, %v1661
          %v1726 = vpack.c.b16 %v1662, %v1662
          %v1727 = vpack.c.b16 %v1663, %v1663
          %v1728 = vpack.c.b16 %v1664, %v1664
          %v1729 = vpack.c.b16 %v1665, %v1665
          %v1730 = vpack.c.b16 %v1666, %v1666
          %v1731 = vpack.c.b16 %v1667, %v1667
          %v1732 = vpack.c.b16 %v1668, %v1668
          %v1733 = vpack.c.b16 %v1669, %v1669
          %v1734 = vpack.c.b16 %v1670, %v1670
          %1799 = vst [vmem:[%s233] sm:$0xf] %v1671
          %1800 = vst [vmem:[%s233 + $0x4] sm:$0xf] %v1672
          %1801 = vst [vmem:[%s233 + $0x8] sm:$0xf] %v1673
          %1802 = vst [vmem:[%s233 + $0xc] sm:$0xf] %v1674
          %1803 = vst [vmem:[%s233 + $0x10] sm:$0xf] %v1675
          %1804 = vst [vmem:[%s233 + $0x14] sm:$0xf] %v1676
          %1805 = vst [vmem:[%s233 + $0x18] sm:$0xf] %v1677
          %1806 = vst [vmem:[%s233 + $0x1c] sm:$0xf] %v1678
          %1807 = vst [vmem:[%s233 + $0x20] sm:$0xf] %v1679
          %1808 = vst [vmem:[%s233 + $0x24] sm:$0xf] %v1680
          %1809 = vst [vmem:[%s233 + $0x28] sm:$0xf] %v1681
          %1810 = vst [vmem:[%s233 + $0x2c] sm:$0xf] %v1682
          %1811 = vst [vmem:[%s233 + $0x30] sm:$0xf] %v1683
          %1812 = vst [vmem:[%s233 + $0x34] sm:$0xf] %v1684
          %1813 = vst [vmem:[%s233 + $0x38] sm:$0xf] %v1685
          %1814 = vst [vmem:[%s233 + $0x3c] sm:$0xf] %v1686
          %1815 = vst [vmem:[%s233 + $0x40] sm:$0xf] %v1687
          %1816 = vst [vmem:[%s233 + $0x44] sm:$0xf] %v1688
          %1817 = vst [vmem:[%s233 + $0x48] sm:$0xf] %v1689
          %1818 = vst [vmem:[%s233 + $0x4c] sm:$0xf] %v1690
          %1819 = vst [vmem:[%s233 + $0x50] sm:$0xf] %v1691
          %1820 = vst [vmem:[%s233 + $0x54] sm:$0xf] %v1692
          %1821 = vst [vmem:[%s233 + $0x58] sm:$0xf] %v1693
          %1822 = vst [vmem:[%s233 + $0x5c] sm:$0xf] %v1694
          %1823 = vst [vmem:[%s233 + $0x60] sm:$0xf] %v1695
          %1824 = vst [vmem:[%s233 + $0x64] sm:$0xf] %v1696
          %1825 = vst [vmem:[%s233 + $0x68] sm:$0xf] %v1697
          %1826 = vst [vmem:[%s233 + $0x6c] sm:$0xf] %v1698
          %1827 = vst [vmem:[%s233 + $0x70] sm:$0xf] %v1699
          %1828 = vst [vmem:[%s233 + $0x74] sm:$0xf] %v1700
          %1829 = vst [vmem:[%s233 + $0x78] sm:$0xf] %v1701
          %1830 = vst [vmem:[%s233 + $0x7c] sm:$0xf] %v1702
          %1831 = vst [vmem:[%s233 + $0x80] sm:$0xf] %v1703
          %1832 = vst [vmem:[%s233 + $0x84] sm:$0xf] %v1704
          %1833 = vst [vmem:[%s233 + $0x88] sm:$0xf] %v1705
          %1834 = vst [vmem:[%s233 + $0x8c] sm:$0xf] %v1706
          %1835 = vst [vmem:[%s233 + $0x90] sm:$0xf] %v1707
          %1836 = vst [vmem:[%s233 + $0x94] sm:$0xf] %v1708
          %1837 = vst [vmem:[%s233 + $0x98] sm:$0xf] %v1709
          %1838 = vst [vmem:[%s233 + $0x9c] sm:$0xf] %v1710
          %1839 = vst [vmem:[%s233 + $0xa0] sm:$0xf] %v1711
          %1840 = vst [vmem:[%s233 + $0xa4] sm:$0xf] %v1712
          %1841 = vst [vmem:[%s233 + $0xa8] sm:$0xf] %v1713
          %1842 = vst [vmem:[%s233 + $0xac] sm:$0xf] %v1714
          %1843 = vst [vmem:[%s233 + $0xb0] sm:$0xf] %v1715
          %1844 = vst [vmem:[%s233 + $0xb4] sm:$0xf] %v1716
          %1845 = vst [vmem:[%s233 + $0xb8] sm:$0xf] %v1717
          %1846 = vst [vmem:[%s233 + $0xbc] sm:$0xf] %v1718
          %1847 = vst [vmem:[%s233 + $0xc0] sm:$0xf] %v1719
          %1848 = vst [vmem:[%s233 + $0xc4] sm:$0xf] %v1720
          %1849 = vst [vmem:[%s233 + $0xc8] sm:$0xf] %v1721
          %1850 = vst [vmem:[%s233 + $0xcc] sm:$0xf] %v1722
          %1851 = vst [vmem:[%s233 + $0xd0] sm:$0xf] %v1723
          %1852 = vst [vmem:[%s233 + $0xd4] sm:$0xf] %v1724
          %1853 = vst [vmem:[%s233 + $0xd8] sm:$0xf] %v1725
          %1854 = vst [vmem:[%s233 + $0xdc] sm:$0xf] %v1726
          %1855 = vst [vmem:[%s233 + $0xe0] sm:$0xf] %v1727
          %1856 = vst [vmem:[%s233 + $0xe4] sm:$0xf] %v1728
          %1857 = vst [vmem:[%s233 + $0xe8] sm:$0xf] %v1729
          %1858 = vst [vmem:[%s233 + $0xec] sm:$0xf] %v1730
          %1859 = vst [vmem:[%s233 + $0xf0] sm:$0xf] %v1731
          %1860 = vst [vmem:[%s233 + $0xf4] sm:$0xf] %v1732
          %1861 = vst [vmem:[%s233 + $0xf8] sm:$0xf] %v1733
          %1862 = vst [vmem:[%s233 + $0xfc] sm:$0xf] %v1734
        $region40: #{tpu_custom_call.1} parent=31 // pred_fallthru
          _
        %s1863 = sand.u32 %s128, 1
        %s1864 = scalar_lea.sflag [#allocation4], %s1863
        %s1865 = sand.u32 %s128, 1
        %s1866 = smul.addr %s1865, 256
        %s1867 = scalar_lea.vmem [#allocation3], %s1866
        // Predicated region
        $region41: #{tpu_custom_call.1} parent=31 // pred_check
          %p1868 = pneg %p138
        $region42: #{tpu_custom_call.1} parent=31 // pred_check_branch
          %1870 = sbr.rel (%p1868) target = $region44
        $region43: #{tpu_custom_call.1} parent=31 // pred_region
          %s1871 = smul.u32 64, %s22
          %s1873 = ssub.s32 4096, 4096
          %1874 = vsyncadd %s1864, %s1873
          %s1875 = sadd.s32 %s23, %s1871
          %s1876 = smul.addr %s1875, 64
          %s1877 = scalar_lea.hbm %s3, %s1876
          %s1878 = sshll.u32 %s1867, 4
          %s1879 = int_to_ptr.vmem [resolvable:$true] %s1878
          %1884 = dma.vmem_to_hbm [thread:$0]  %s1879, 4096, %s1877, %s1864, 64, 64, 4
        $region44: #{tpu_custom_call.1} parent=31 // pred_fallthru
          _
      $region32: #{tpu_custom_call.1} parent=5 // pred_fallthru
        _
      %p1885 = scmp.le.s32.totalorder 2, %s12
      // Predicated region
      $region45: #{tpu_custom_call.1} parent=5 // pred_check
        %p1886 = pneg %p1885
      $region46: #{tpu_custom_call.1} parent=5 // pred_check_branch
        %1888 = sbr.rel (%p1886) target = $region48
      $region47: #{tpu_custom_call.1} parent=5 // pred_region
        %s1889 = ssub.s32 %s12, 2
        // Predicated region
        $region49: #{tpu_custom_call.1} parent=47 // pred_check
          %p1890 = pneg %p144
        $region50: #{tpu_custom_call.1} parent=47 // pred_check_branch
          %1892 = sbr.rel (%p1890) target = $region52
        $region51: #{tpu_custom_call.1} parent=47 // pred_region
          %s1893 = sand.u32 %s129, 1
          %s1894 = scalar_lea.sflag [#allocation4], %s1893
          %s1895 = sand.u32 %s129, 1
          %s1896 = smul.addr %s1895, 256
          %s1897 = scalar_lea.vmem [#allocation3], %s1896
          %1898 = dma.done %s1894, 4096
        $region52: #{tpu_custom_call.1} parent=47 // pred_fallthru
          _
      $region48: #{tpu_custom_call.1} parent=5 // pred_fallthru
        _
    $region6: #{tpu_custom_call.1} parent=1 // loop_footer
      %s16 = sadd.s32 1, %s12
    $region7: #{tpu_custom_call.1} parent=1 // loop_footer_branch
      %11 = sbr.rel target = $region3
    $region8: #{tpu_custom_call.1} parent=1 // loop_exit
      _
    %1899 = vsyncpa [#allocation4], 1
    %s1900 = scalar_lea.sflag [#allocation4], 1
    %1901 = vsyncpa %s1900, 1

</llo_original>
